<compile_context>
chip_gen: v7x
topology: tpu7x:2x2x1
jax: 0.10.0
libtpu: 0.0.40
codegen_flags: <defaults>
</compile_context>

<pallas_src>
import functools

import numpy as np
import jax
import jax.numpy as jnp
from jax import lax
from jax.experimental import pallas as pl
from jax.experimental.pallas import tpu as pltpu

ELEM_LIST_LEN = 23                       # len(ELEM_LIST)
ATOM_FDIM = ELEM_LIST_LEN + 6 + 5 + 1    # 35
BOND_FDIM = 5
MAX_NB = 10


def _round_up(x, m):
    return ((x + m - 1) // m) * m


# --------------------------------------------------------------------------- #
# Kernel: one molecule bucket per grid step.
# All neighbour gather+sums (index_select_ND + sum over MAX_NB) are expressed as
# per-bucket adjacency count-matrix matmuls so the whole hot path runs on the MXU.
# --------------------------------------------------------------------------- #
def _jtmpn_kernel(depth,
                  fb_ref, fat_ref,
                  ab_tree_ref, ab_graph_ref,
                  aa_tree_ref, aa_graph_ref,
                  pool_ref, tree_msg_ref,
                  wi_ref, wh_ref, wo_atom_ref, wo_nei_ref, bo_ref,
                  out_ref):
    f32 = jnp.float32
    bf16 = jnp.bfloat16

    fb = fb_ref[0]                 # (B_TILE, FBp)     bf16
    ab_graph = ab_graph_ref[0]     # (B_TILE, B_TILE)  bf16
    tree_msg = tree_msg_ref[...]   # (TMp, Hp)         bf16
    wh = wh_ref[...]               # (Hp, Hp)          bf16

    # binput = W_i(fbonds); graph_message = relu(binput)
    binput = jnp.dot(fb, wi_ref[...], preferred_element_type=f32)
    gmsg = jnp.maximum(binput, 0.0)

    # Loop-invariant tree-message aggregation, hoisted out of the depth loop.
    nei_tree_b = jnp.dot(ab_tree_ref[0], tree_msg, preferred_element_type=f32)

    # depth-1 message-passing steps (depth is a static python int -> fully unrolled).
    for _ in range(depth - 1):
        nei = nei_tree_b + jnp.dot(ab_graph, gmsg.astype(bf16),
                                   preferred_element_type=f32)
        nei = jnp.dot(nei.astype(bf16), wh, preferred_element_type=f32)
        gmsg = jnp.maximum(binput + nei, 0.0)

    # Atom-level aggregation + W_o (split column-wise so no concat is needed).
    nei_a = (jnp.dot(aa_tree_ref[0], tree_msg, preferred_element_type=f32)
             + jnp.dot(aa_graph_ref[0], gmsg.astype(bf16),
                       preferred_element_type=f32))
    atom_h = jnp.maximum(
        jnp.dot(fat_ref[0], wo_atom_ref[...], preferred_element_type=f32)
        + jnp.dot(nei_a.astype(bf16), wo_nei_ref[...], preferred_element_type=f32)
        + bo_ref[...],
        0.0)

    # Per-molecule mean pooling (pool rows hold 1/n_atoms for that molecule's atoms).
    # Tiny matmul -> keep it in f32 / highest precision (negligible cost).
    out_ref[0] = jnp.dot(pool_ref[0], atom_h, preferred_element_type=f32,
                         precision=lax.Precision.HIGHEST)


# --------------------------------------------------------------------------- #
# Wrapper: host-side graph re-layout (numpy) + pallas_call.
# --------------------------------------------------------------------------- #
def jtmpn_forward(fatoms, fbonds, agraph, bgraph, tree_message, scope,
                  W_i, W_h, W_o, b_o, depth, mols_per_tile=1):
    hidden = int(W_i.shape[0])
    total_atoms = int(fatoms.shape[0])
    total_bonds = int(fbonds.shape[0])
    total_mess = int(tree_message.shape[0])
    num_mols = len(scope)

    fatoms_np = np.asarray(jax.device_get(fatoms), np.float32)
    fbonds_np = np.asarray(jax.device_get(fbonds), np.float32)
    agraph_np = np.asarray(jax.device_get(agraph))
    bgraph_np = np.asarray(jax.device_get(bgraph))

    # ---- molecule membership of every atom / bond ---------------------------
    atom_mol = np.zeros(total_atoms, np.int64)
    for m, (st, le) in enumerate(scope):
        atom_mol[st:st + le] = m

    # Every bond appears exactly once in agraph (at its target atom) -> derive
    # bond -> molecule from there; forward/backward fill as a safety fallback
    # (bonds are laid out per-molecule contiguously in the original construction).
    bond_mol = np.full(total_bonds, -1, np.int64)
    for a in range(total_atoms):
        for e in agraph_np[a]:
            e = int(e)
            if e >= total_mess:
                bond_mol[e - total_mess] = atom_mol[a]
    for b in range(1, total_bonds):
        if bond_mol[b] < 0:
            bond_mol[b] = bond_mol[b - 1]
    for b in range(total_bonds - 2, -1, -1):
        if bond_mol[b] < 0:
            bond_mol[b] = bond_mol[b + 1]
    bond_mol = np.clip(bond_mol, 0, num_mols - 1)

    # ---- bucket molecules (mols_per_tile per grid step) ----------------------
    mpt = max(1, int(mols_per_tile))
    num_buckets = -(-num_mols // mpt)
    mol_bucket = np.arange(num_mols) // mpt
    mol_slot = np.arange(num_mols) % mpt

    atoms_per_bucket = np.zeros(num_buckets, np.int64)
    bonds_per_bucket = np.zeros(num_buckets, np.int64)
    for m, (st, le) in enumerate(scope):
        atoms_per_bucket[mol_bucket[m]] += le
    for b in range(total_bonds):
        bonds_per_bucket[mol_bucket[bond_mol[b]]] += 1

    A_TILE = _round_up(max(int(atoms_per_bucket.max()), 1), 8)
    B_TILE = _round_up(max(int(bonds_per_bucket.max()), 1), 8)
    TMp = _round_up(total_mess, 8)
    FAp = _round_up(ATOM_FDIM, 128)
    FBp = _round_up(ATOM_FDIM + BOND_FDIM, 128)
    Hp = _round_up(hidden, 128)

    # local slot of every atom / bond within its bucket
    atom_bucket = mol_bucket[atom_mol]
    atom_local = np.zeros(total_atoms, np.int64)
    cnt = np.zeros(num_buckets, np.int64)
    for a in range(total_atoms):
        atom_local[a] = cnt[atom_bucket[a]]
        cnt[atom_bucket[a]] += 1
    bond_bucket = mol_bucket[bond_mol]
    bond_local = np.zeros(total_bonds, np.int64)
    cnt = np.zeros(num_buckets, np.int64)
    for b in range(total_bonds):
        bond_local[b] = cnt[bond_bucket[b]]
        cnt[bond_bucket[b]] += 1

    # ---- packed per-bucket tensors + block-diagonal adjacency counts (numpy) --
    fat_t = np.zeros((num_buckets, A_TILE, FAp), np.float32)
    fb_t = np.zeros((num_buckets, B_TILE, FBp), np.float32)
    ab_tree = np.zeros((num_buckets, B_TILE, TMp), np.float32)
    ab_graph = np.zeros((num_buckets, B_TILE, B_TILE), np.float32)
    aa_tree = np.zeros((num_buckets, A_TILE, TMp), np.float32)
    aa_graph = np.zeros((num_buckets, A_TILE, B_TILE), np.float32)
    pool = np.zeros((num_buckets, mpt, A_TILE), np.float32)

    fat_t[atom_bucket, atom_local, :fatoms_np.shape[1]] = fatoms_np
    fb_t[bond_bucket, bond_local, :fbonds_np.shape[1]] = fbonds_np

    for a in range(total_atoms):
        bk, la = atom_bucket[a], atom_local[a]
        for e in agraph_np[a]:
            e = int(e)
            if e < total_mess:
                aa_tree[bk, la, e] += 1.0          # index 0 = zero placeholder message
            else:
                aa_graph[bk, la, bond_local[e - total_mess]] += 1.0
    for b1 in range(total_bonds):
        bk, lb = bond_bucket[b1], bond_local[b1]
        for e in bgraph_np[b1]:
            e = int(e)
            if e < total_mess:
                ab_tree[bk, lb, e] += 1.0
            else:
                ab_graph[bk, lb, bond_local[e - total_mess]] += 1.0

    for m, (st, le) in enumerate(scope):
        a0 = atom_local[st]
        pool[mol_bucket[m], mol_slot[m], a0:a0 + le] = 1.0 / le

    # ---- device tensors: bf16 MXU operands, f32 where precision matters -------
    bf16 = jnp.bfloat16
    fb_d = jnp.asarray(fb_t, bf16)
    fat_d = jnp.asarray(fat_t, bf16)
    ab_tree_d = jnp.asarray(ab_tree, bf16)    # integer counts: exact in bf16
    ab_graph_d = jnp.asarray(ab_graph, bf16)
    aa_tree_d = jnp.asarray(aa_tree, bf16)
    aa_graph_d = jnp.asarray(aa_graph, bf16)
    pool_d = jnp.asarray(pool, jnp.float32)

    tm_np = np.zeros((TMp, Hp), np.float32)
    tm_np[:total_mess, :hidden] = np.asarray(jax.device_get(tree_message), np.float32)
    tm_d = jnp.asarray(tm_np, bf16)

    def pad2(x, r, c):
        x = np.asarray(x, np.float32)
        out = np.zeros((r, c), np.float32)
        out[:x.shape[0], :x.shape[1]] = x
        return out

    W_i_np = np.asarray(jax.device_get(W_i), np.float32)
    W_h_np = np.asarray(jax.device_get(W_h), np.float32)
    W_o_np = np.asarray(jax.device_get(W_o), np.float32)
    b_o_np = np.asarray(jax.device_get(b_o), np.float32)

    wi_d = jnp.asarray(pad2(W_i_np.T, FBp, Hp), bf16)
    wh_d = jnp.asarray(pad2(W_h_np.T, Hp, Hp), bf16)
    wo_atom_d = jnp.asarray(pad2(W_o_np[:, :ATOM_FDIM].T, FAp, Hp), bf16)
    wo_nei_d = jnp.asarray(pad2(W_o_np[:, ATOM_FDIM:].T, Hp, Hp), bf16)
    bo_np = np.zeros((1, Hp), np.float32)
    bo_np[0, :hidden] = b_o_np
    bo_d = jnp.asarray(bo_np)

    inputs = (fb_d, fat_d, ab_tree_d, ab_graph_d, aa_tree_d, aa_graph_d,
              pool_d, tm_d, wi_d, wh_d, wo_atom_d, wo_nei_d, bo_d)

    def mol_spec(shape):
        nd = len(shape)
        return pl.BlockSpec((1,) + tuple(shape[1:]),
                            lambda g, nd=nd: (g,) + (0,) * (nd - 1))

    def fixed_spec(shape):
        nd = len(shape)
        return pl.BlockSpec(tuple(shape), lambda g, nd=nd: (0,) * nd)

    in_specs = [
        mol_spec(fb_d.shape), mol_spec(fat_d.shape),
        mol_spec(ab_tree_d.shape), mol_spec(ab_graph_d.shape),
        mol_spec(aa_tree_d.shape), mol_spec(aa_graph_d.shape),
        mol_spec(pool_d.shape),
        fixed_spec(tm_d.shape), fixed_spec(wi_d.shape), fixed_spec(wh_d.shape),
        fixed_spec(wo_atom_d.shape), fixed_spec(wo_nei_d.shape),
        fixed_spec(bo_d.shape),
    ]
    out_specs = pl.BlockSpec((1, mpt, Hp), lambda g: (g, 0, 0))

    # Explicit VMEM budget: per-bucket blocks x double buffering + f32 temporaries,
    # capped at v7x's 64 MiB physical VMEM (well within v5e/v6e's 128 MiB).
    f32b, bf16b = 4, 2
    blk_in = bf16b * (B_TILE * FBp + A_TILE * FAp + B_TILE * TMp + B_TILE * B_TILE
                      + A_TILE * TMp + A_TILE * B_TILE + TMp * Hp + FBp * Hp
                      + 2 * Hp * Hp + FAp * Hp) + f32b * (mpt * A_TILE + Hp)
    blk_out = f32b * mpt * Hp
    tmp_f32 = f32b * (6 * B_TILE * Hp + 4 * A_TILE * Hp)
    vmem_limit = int(min(max(2 * (blk_in + blk_out) + tmp_f32 + (8 << 20), 32 << 20),
                         64 << 20))

    out = pl.pallas_call(
        functools.partial(_jtmpn_kernel, depth),
        out_shape=jax.ShapeDtypeStruct((num_buckets, mpt, Hp), jnp.float32),
        grid=(num_buckets,),
        in_specs=in_specs,
        out_specs=out_specs,
        compiler_params=pltpu.CompilerParams(
            dimension_semantics=("parallel",),
            vmem_limit_bytes=vmem_limit),
    )(*inputs)

    return out.reshape(num_buckets * mpt, Hp)[:num_mols, :hidden]


# --------------------------------------------------------------------------- #
# Pure-JAX reference (f32, highest precision) mirroring the PyTorch forward
# (post graph construction).
# --------------------------------------------------------------------------- #
def jtmpn_ref(fatoms, fbonds, agraph, bgraph, tree_message, scope,
              W_i, W_h, W_o, b_o, depth):
    hp = lax.Precision.HIGHEST
    binput = jnp.dot(fbonds, W_i.T, precision=hp)
    gmsg = jnp.maximum(binput, 0.0)
    for _ in range(depth - 1):
        message = jnp.concatenate([tree_message, gmsg], axis=0)
        nei = message[bgraph].sum(axis=1)
        nei = jnp.dot(nei, W_h.T, precision=hp)
        gmsg = jnp.maximum(binput + nei, 0.0)
    message = jnp.concatenate([tree_message, gmsg], axis=0)
    nei_a = message[agraph].sum(axis=1)
    ainput = jnp.concatenate([fatoms, nei_a], axis=1)
    atom_h = jnp.maximum(jnp.dot(ainput, W_o.T, precision=hp) + b_o, 0.0)
    vecs = [atom_h[st:st + le].sum(axis=0) / le for st, le in scope]
    return jnp.stack(vecs, axis=0)


if __name__ == "__main__":
    hidden, depth = 32, 3
    key = jax.random.PRNGKey(0)
    k_atom, k_bond, k_tree, kw1, kw2, kw3, kw4 = jax.random.split(key, 7)

    # ---- synthetic candidate batch (replaces RDKit featurization) ------------
    # TODO(synk): RDKit mol parsing / atom_features / bond_features / in_bonds
    # construction is host-side Python in the original; here we synthesize the
    # equivalent tensors directly.
    mol_sizes = [5, 6]
    total_atoms = sum(mol_sizes)
    fatoms = jax.random.bernoulli(
        k_atom, 0.2, (total_atoms, ATOM_FDIM)).astype(jnp.float32)

    total_mess = 4  # row 0 is the all-zero placeholder message
    tree_message = jnp.concatenate(
        [jnp.zeros((1, hidden), jnp.float32),
         0.1 * jax.random.normal(k_tree, (total_mess - 1, hidden), jnp.float32)],
        axis=0)

    # chain bonds per molecule (+ a ring closure on the 6-atom molecule)
    undirected, scope, off = [], [], 0
    for n in mol_sizes:
        scope.append((off, n))
        for i in range(n - 1):
            undirected.append((off + i, off + i + 1))
        if n >= 6:
            undirected.append((off, off + n - 1))
        off += n

    bond_feats = jax.random.bernoulli(
        k_bond, 0.5, (len(undirected), BOND_FDIM)).astype(jnp.float32)

    in_bonds = [[] for _ in range(total_atoms)]
    all_bonds, fbond_rows = [], []
    for bi, (x, y) in enumerate(undirected):
        b = total_mess + len(all_bonds)
        all_bonds.append((x, y))
        fbond_rows.append(jnp.concatenate([fatoms[x], bond_feats[bi]], axis=0))
        in_bonds[y].append(b)
        b = total_mess + len(all_bonds)
        all_bonds.append((y, x))
        fbond_rows.append(jnp.concatenate([fatoms[y], bond_feats[bi]], axis=0))
        in_bonds[x].append(b)
    # attach a few incoming tree messages (indices 1..total_mess-1)
    in_bonds[0].append(1)
    in_bonds[3].append(2)
    in_bonds[6].append(3)

    total_bonds = len(all_bonds)
    fbonds = jnp.stack(fbond_rows, axis=0)

    agraph_np = np.zeros((total_atoms, MAX_NB), dtype=np.int32)
    for a in range(total_atoms):
        for i, b in enumerate(in_bonds[a]):
            agraph_np[a, i] = b
    bgraph_np = np.zeros((total_bonds, MAX_NB), dtype=np.int32)
    for b1 in range(total_bonds):
        x, y = all_bonds[b1]
        for i, b2 in enumerate(in_bonds[x]):
            if b2 < total_mess or all_bonds[b2 - total_mess][0] != y:
                bgraph_np[b1, i] = b2
    agraph = jnp.asarray(agraph_np)
    bgraph = jnp.asarray(bgraph_np)

    # ---- deterministic parameters (shapes from JTMPN.__init__) ---------------
    fan_i = ATOM_FDIM + BOND_FDIM
    fan_o = ATOM_FDIM + hidden
    W_i = jax.random.uniform(kw1, (hidden, fan_i), jnp.float32, -1.0, 1.0) / jnp.sqrt(fan_i)
    W_h = jax.random.uniform(kw2, (hidden, hidden), jnp.float32, -1.0, 1.0) / jnp.sqrt(hidden)
    W_o = jax.random.uniform(kw3, (hidden, fan_o), jnp.float32, -1.0, 1.0) / jnp.sqrt(fan_o)
    b_o = jax.random.uniform(kw4, (hidden,), jnp.float32, -1.0, 1.0) / jnp.sqrt(fan_o)

    # ---- run kernel + verify --------------------------------------------------
    out = jtmpn_forward(fatoms, fbonds, agraph, bgraph, tree_message, scope,
                        W_i, W_h, W_o, b_o, depth, mols_per_tile=1)
    out = jax.block_until_ready(out)

    ref = jtmpn_ref(fatoms, fbonds, agraph, bgraph, tree_message, scope,
                    W_i, W_h, W_o, b_o, depth)

    assert out.shape == (len(mol_sizes), hidden)
    assert bool(jnp.all(jnp.isfinite(out)))
    max_err = float(jnp.max(jnp.abs(out - ref)))
    # bf16 MXU operands with f32 accumulation -> allow bf16-level tolerance
    assert bool(jnp.allclose(out, ref, atol=3e-2, rtol=3e-2)), max_err
    print("KERNEL_OK")
</pallas_src>

<mosaic_0001>
module attributes {stable_mosaic.version = 11 : i64} {
  func.func @_jtmpn_kernel(%arg0: i32, %arg1: memref<1x16x128xbf16, #tpu.memory_space<vmem>>, %arg2: memref<1x8x128xbf16, #tpu.memory_space<vmem>>, %arg3: memref<1x16x8xbf16, #tpu.memory_space<vmem>>, %arg4: memref<1x16x16xbf16, #tpu.memory_space<vmem>>, %arg5: memref<1x8x8xbf16, #tpu.memory_space<vmem>>, %arg6: memref<1x8x16xbf16, #tpu.memory_space<vmem>>, %arg7: memref<1x1x8xf32, #tpu.memory_space<vmem>>, %arg8: memref<8x128xbf16, #tpu.memory_space<vmem>>, %arg9: memref<128x128xbf16, #tpu.memory_space<vmem>>, %arg10: memref<128x128xbf16, #tpu.memory_space<vmem>>, %arg11: memref<128x128xbf16, #tpu.memory_space<vmem>>, %arg12: memref<128x128xbf16, #tpu.memory_space<vmem>>, %arg13: memref<1x128xf32, #tpu.memory_space<vmem>>, %arg14: memref<1x1x128xf32, #tpu.memory_space<vmem>>) attributes {dimension_semantics = [#tpu.dimension_semantics<parallel>], iteration_bounds = array<i64: 2>, scalar_prefetch = 0 : i64, scratch_operands = 0 : i64, tpu.core_type = #tpu.core_type<tc>, window_params = [{transform_indices = @transform_0, window_bounds = array<i64: 1, 16, 128>}, {transform_indices = @transform_1, window_bounds = array<i64: 1, 8, 128>}, {transform_indices = @transform_2, window_bounds = array<i64: 1, 16, 8>}, {transform_indices = @transform_3, window_bounds = array<i64: 1, 16, 16>}, {transform_indices = @transform_4, window_bounds = array<i64: 1, 8, 8>}, {transform_indices = @transform_5, window_bounds = array<i64: 1, 8, 16>}, {transform_indices = @transform_6, window_bounds = array<i64: 1, 1, 8>}, {pipeline_mode = #tpu.pipeline_mode<synchronous>, transform_indices = @transform_7, window_bounds = array<i64: 8, 128>}, {pipeline_mode = #tpu.pipeline_mode<synchronous>, transform_indices = @transform_8, window_bounds = array<i64: 128, 128>}, {pipeline_mode = #tpu.pipeline_mode<synchronous>, transform_indices = @transform_9, window_bounds = array<i64: 128, 128>}, {pipeline_mode = #tpu.pipeline_mode<synchronous>, transform_indices = @transform_10, window_bounds = array<i64: 128, 128>}, {pipeline_mode = #tpu.pipeline_mode<synchronous>, transform_indices = @transform_11, window_bounds = array<i64: 128, 128>}, {pipeline_mode = #tpu.pipeline_mode<synchronous>, transform_indices = @transform_12, window_bounds = array<i64: 1, 128>}, {transform_indices = @transform_13, window_bounds = array<i64: 1, 1, 128>}]} {
    %c0 = arith.constant 0 : index
    %c0_0 = arith.constant 0 : index
    %c0_1 = arith.constant 0 : index
    %0 = vector.load %arg1[%c0, %c0_0, %c0_1] : memref<1x16x128xbf16, #tpu.memory_space<vmem>>, vector<1x16x128xbf16>
    %1 = vector.shape_cast %0 : vector<1x16x128xbf16> to vector<16x128xbf16>
    %c0_2 = arith.constant 0 : index
    %c0_3 = arith.constant 0 : index
    %c0_4 = arith.constant 0 : index
    %2 = vector.load %arg4[%c0_2, %c0_3, %c0_4] : memref<1x16x16xbf16, #tpu.memory_space<vmem>>, vector<1x16x16xbf16>
    %3 = vector.shape_cast %2 : vector<1x16x16xbf16> to vector<16x16xbf16>
    %c0_5 = arith.constant 0 : index
    %c0_6 = arith.constant 0 : index
    %4 = vector.load %arg8[%c0_5, %c0_6] : memref<8x128xbf16, #tpu.memory_space<vmem>>, vector<8x128xbf16>
    %c0_7 = arith.constant 0 : index
    %c0_8 = arith.constant 0 : index
    %5 = vector.load %arg10[%c0_7, %c0_8] : memref<128x128xbf16, #tpu.memory_space<vmem>>, vector<128x128xbf16>
    %c0_9 = arith.constant 0 : index
    %c0_10 = arith.constant 0 : index
    %6 = vector.load %arg9[%c0_9, %c0_10] : memref<128x128xbf16, #tpu.memory_space<vmem>>, vector<128x128xbf16>
    %cst = arith.constant dense<0.000000e+00> : vector<16x128xf32>
    %7 = tpu.matmul %1, %6, %cst {dimension_numbers = #tpu.dot_dimension_numbers<[1], [0], [0], [1], [0, 0, 1, 1], [], []>} : vector<16x128xbf16>, vector<128x128xbf16>, vector<16x128xf32> -> vector<16x128xf32>
    %cst_11 = arith.constant 0.000000e+00 : f32
    %8 = vector.broadcast %cst_11 : f32 to vector<16x128xf32>
    %9 = arith.maximumf %7, %8 : vector<16x128xf32>
    %c0_12 = arith.constant 0 : index
    %c0_13 = arith.constant 0 : index
    %c0_14 = arith.constant 0 : index
    %10 = vector.load %arg3[%c0_12, %c0_13, %c0_14] : memref<1x16x8xbf16, #tpu.memory_space<vmem>>, vector<1x16x8xbf16>
    %11 = vector.shape_cast %10 : vector<1x16x8xbf16> to vector<16x8xbf16>
    %cst_15 = arith.constant dense<0.000000e+00> : vector<16x128xf32>
    %12 = tpu.matmul %11, %4, %cst_15 {dimension_numbers = #tpu.dot_dimension_numbers<[1], [0], [0], [1], [0, 0, 1, 1], [], []>} : vector<16x8xbf16>, vector<8x128xbf16>, vector<16x128xf32> -> vector<16x128xf32>
    %13 = arith.truncf %9 : vector<16x128xf32> to vector<16x128xbf16>
    %cst_16 = arith.constant dense<0.000000e+00> : vector<16x128xf32>
    %14 = tpu.matmul %3, %13, %cst_16 {dimension_numbers = #tpu.dot_dimension_numbers<[1], [0], [0], [1], [0, 0, 1, 1], [], []>} : vector<16x16xbf16>, vector<16x128xbf16>, vector<16x128xf32> -> vector<16x128xf32>
    %15 = arith.addf %12, %14 : vector<16x128xf32>
    %16 = arith.truncf %15 : vector<16x128xf32> to vector<16x128xbf16>
    %cst_17 = arith.constant dense<0.000000e+00> : vector<16x128xf32>
    %17 = tpu.matmul %16, %5, %cst_17 {dimension_numbers = #tpu.dot_dimension_numbers<[1], [0], [0], [1], [0, 0, 1, 1], [], []>} : vector<16x128xbf16>, vector<128x128xbf16>, vector<16x128xf32> -> vector<16x128xf32>
    %18 = arith.addf %7, %17 : vector<16x128xf32>
    %cst_18 = arith.constant 0.000000e+00 : f32
    %19 = vector.broadcast %cst_18 : f32 to vector<16x128xf32>
    %20 = arith.maximumf %18, %19 : vector<16x128xf32>
    %21 = arith.truncf %20 : vector<16x128xf32> to vector<16x128xbf16>
    %cst_19 = arith.constant dense<0.000000e+00> : vector<16x128xf32>
    %22 = tpu.matmul %3, %21, %cst_19 {dimension_numbers = #tpu.dot_dimension_numbers<[1], [0], [0], [1], [0, 0, 1, 1], [], []>} : vector<16x16xbf16>, vector<16x128xbf16>, vector<16x128xf32> -> vector<16x128xf32>
    %23 = arith.addf %12, %22 : vector<16x128xf32>
    %24 = arith.truncf %23 : vector<16x128xf32> to vector<16x128xbf16>
    %cst_20 = arith.constant dense<0.000000e+00> : vector<16x128xf32>
    %25 = tpu.matmul %24, %5, %cst_20 {dimension_numbers = #tpu.dot_dimension_numbers<[1], [0], [0], [1], [0, 0, 1, 1], [], []>} : vector<16x128xbf16>, vector<128x128xbf16>, vector<16x128xf32> -> vector<16x128xf32>
    %26 = arith.addf %7, %25 : vector<16x128xf32>
    %cst_21 = arith.constant 0.000000e+00 : f32
    %27 = vector.broadcast %cst_21 : f32 to vector<16x128xf32>
    %28 = arith.maximumf %26, %27 : vector<16x128xf32>
    %c0_22 = arith.constant 0 : index
    %c0_23 = arith.constant 0 : index
    %c0_24 = arith.constant 0 : index
    %29 = vector.load %arg5[%c0_22, %c0_23, %c0_24] : memref<1x8x8xbf16, #tpu.memory_space<vmem>>, vector<1x8x8xbf16>
    %30 = vector.shape_cast %29 : vector<1x8x8xbf16> to vector<8x8xbf16>
    %cst_25 = arith.constant dense<0.000000e+00> : vector<8x128xf32>
    %31 = tpu.matmul %30, %4, %cst_25 {dimension_numbers = #tpu.dot_dimension_numbers<[1], [0], [0], [1], [0, 0, 1, 1], [], []>} : vector<8x8xbf16>, vector<8x128xbf16>, vector<8x128xf32> -> vector<8x128xf32>
    %c0_26 = arith.constant 0 : index
    %c0_27 = arith.constant 0 : index
    %c0_28 = arith.constant 0 : index
    %32 = vector.load %arg6[%c0_26, %c0_27, %c0_28] : memref<1x8x16xbf16, #tpu.memory_space<vmem>>, vector<1x8x16xbf16>
    %33 = vector.shape_cast %32 : vector<1x8x16xbf16> to vector<8x16xbf16>
    %34 = arith.truncf %28 : vector<16x128xf32> to vector<16x128xbf16>
    %cst_29 = arith.constant dense<0.000000e+00> : vector<8x128xf32>
    %35 = tpu.matmul %33, %34, %cst_29 {dimension_numbers = #tpu.dot_dimension_numbers<[1], [0], [0], [1], [0, 0, 1, 1], [], []>} : vector<8x16xbf16>, vector<16x128xbf16>, vector<8x128xf32> -> vector<8x128xf32>
    %36 = arith.addf %31, %35 : vector<8x128xf32>
    %c0_30 = arith.constant 0 : index
    %c0_31 = arith.constant 0 : index
    %c0_32 = arith.constant 0 : index
    %37 = vector.load %arg2[%c0_30, %c0_31, %c0_32] : memref<1x8x128xbf16, #tpu.memory_space<vmem>>, vector<1x8x128xbf16>
    %38 = vector.shape_cast %37 : vector<1x8x128xbf16> to vector<8x128xbf16>
    %c0_33 = arith.constant 0 : index
    %c0_34 = arith.constant 0 : index
    %39 = vector.load %arg11[%c0_33, %c0_34] : memref<128x128xbf16, #tpu.memory_space<vmem>>, vector<128x128xbf16>
    %cst_35 = arith.constant dense<0.000000e+00> : vector<8x128xf32>
    %40 = tpu.matmul %38, %39, %cst_35 {dimension_numbers = #tpu.dot_dimension_numbers<[1], [0], [0], [1], [0, 0, 1, 1], [], []>} : vector<8x128xbf16>, vector<128x128xbf16>, vector<8x128xf32> -> vector<8x128xf32>
    %41 = arith.truncf %36 : vector<8x128xf32> to vector<8x128xbf16>
    %c0_36 = arith.constant 0 : index
    %c0_37 = arith.constant 0 : index
    %42 = vector.load %arg12[%c0_36, %c0_37] : memref<128x128xbf16, #tpu.memory_space<vmem>>, vector<128x128xbf16>
    %cst_38 = arith.constant dense<0.000000e+00> : vector<8x128xf32>
    %43 = tpu.matmul %41, %42, %cst_38 {dimension_numbers = #tpu.dot_dimension_numbers<[1], [0], [0], [1], [0, 0, 1, 1], [], []>} : vector<8x128xbf16>, vector<128x128xbf16>, vector<8x128xf32> -> vector<8x128xf32>
    %44 = arith.addf %40, %43 : vector<8x128xf32>
    %c0_39 = arith.constant 0 : index
    %c0_40 = arith.constant 0 : index
    %45 = vector.load %arg13[%c0_39, %c0_40] : memref<1x128xf32, #tpu.memory_space<vmem>>, vector<1x128xf32>
    %46 = vector.broadcast %45 : vector<1x128xf32> to vector<8x128xf32>
    %47 = arith.addf %44, %46 : vector<8x128xf32>
    %cst_41 = arith.constant 0.000000e+00 : f32
    %48 = vector.broadcast %cst_41 : f32 to vector<8x128xf32>
    %49 = arith.maximumf %47, %48 : vector<8x128xf32>
    %c0_42 = arith.constant 0 : index
    %c0_43 = arith.constant 0 : index
    %c0_44 = arith.constant 0 : index
    %50 = vector.load %arg7[%c0_42, %c0_43, %c0_44] : memref<1x1x8xf32, #tpu.memory_space<vmem>>, vector<1x1x8xf32>
    %51 = vector.shape_cast %50 : vector<1x1x8xf32> to vector<1x8xf32>
    %cst_45 = arith.constant dense<0.000000e+00> : vector<1x128xf32>
    %52 = tpu.matmul %51, %49, %cst_45 {dimension_numbers = #tpu.dot_dimension_numbers<[1], [0], [0], [1], [0, 0, 1, 1], [], []>, precision = #tpu.contract_precision<fp32>} : vector<1x8xf32>, vector<8x128xf32>, vector<1x128xf32> -> vector<1x128xf32>
    %c0_46 = arith.constant 0 : index
    %c0_47 = arith.constant 0 : index
    %c0_48 = arith.constant 0 : index
    %53 = vector.load %arg14[%c0_46, %c0_47, %c0_48] : memref<1x1x128xf32, #tpu.memory_space<vmem>>, vector<1x1x128xf32>
    %54 = vector.shape_cast %53 : vector<1x1x128xf32> to vector<1x128xf32>
    %55 = vector.shape_cast %52 : vector<1x128xf32> to vector<1x1x128xf32>
    tpu.vector_store %arg14[%c0_46, %c0_47, %c0_48], %55 {strides = array<i32>} : memref<1x1x128xf32, #tpu.memory_space<vmem>>, vector<1x1x128xf32>,
    return
  }
  func.func @transform_0(%arg0: i32) -> (i32, i32, i32) {
    %c0_i32 = arith.constant 0 : i32
    %c0_i32_0 = arith.constant 0 : i32
    %c0_i32_1 = arith.constant 0 : i32
    return %arg0, %c0_i32, %c0_i32_0 : i32, i32, i32
  }
  func.func @transform_1(%arg0: i32) -> (i32, i32, i32) {
    %c0_i32 = arith.constant 0 : i32
    %c0_i32_0 = arith.constant 0 : i32
    %c0_i32_1 = arith.constant 0 : i32
    return %arg0, %c0_i32, %c0_i32_0 : i32, i32, i32
  }
  func.func @transform_2(%arg0: i32) -> (i32, i32, i32) {
    %c0_i32 = arith.constant 0 : i32
    %c0_i32_0 = arith.constant 0 : i32
    %c0_i32_1 = arith.constant 0 : i32
    return %arg0, %c0_i32, %c0_i32_0 : i32, i32, i32
  }
  func.func @transform_3(%arg0: i32) -> (i32, i32, i32) {
    %c0_i32 = arith.constant 0 : i32
    %c0_i32_0 = arith.constant 0 : i32
    %c0_i32_1 = arith.constant 0 : i32
    return %arg0, %c0_i32, %c0_i32_0 : i32, i32, i32
  }
  func.func @transform_4(%arg0: i32) -> (i32, i32, i32) {
    %c0_i32 = arith.constant 0 : i32
    %c0_i32_0 = arith.constant 0 : i32
    %c0_i32_1 = arith.constant 0 : i32
    return %arg0, %c0_i32, %c0_i32_0 : i32, i32, i32
  }
  func.func @transform_5(%arg0: i32) -> (i32, i32, i32) {
    %c0_i32 = arith.constant 0 : i32
    %c0_i32_0 = arith.constant 0 : i32
    %c0_i32_1 = arith.constant 0 : i32
    return %arg0, %c0_i32, %c0_i32_0 : i32, i32, i32
  }
  func.func @transform_6(%arg0: i32) -> (i32, i32, i32) {
    %c0_i32 = arith.constant 0 : i32
    %c0_i32_0 = arith.constant 0 : i32
    %c0_i32_1 = arith.constant 0 : i32
    return %arg0, %c0_i32, %c0_i32_0 : i32, i32, i32
  }
  func.func @transform_7(%arg0: i32) -> (i32, i32) {
    %c0_i32 = arith.constant 0 : i32
    %c0_i32_0 = arith.constant 0 : i32
    %c0_i32_1 = arith.constant 0 : i32
    return %c0_i32, %c0_i32_0 : i32, i32
  }
  func.func @transform_8(%arg0: i32) -> (i32, i32) {
    %c0_i32 = arith.constant 0 : i32
    %c0_i32_0 = arith.constant 0 : i32
    %c0_i32_1 = arith.constant 0 : i32
    return %c0_i32, %c0_i32_0 : i32, i32
  }
  func.func @transform_9(%arg0: i32) -> (i32, i32) {
    %c0_i32 = arith.constant 0 : i32
    %c0_i32_0 = arith.constant 0 : i32
    %c0_i32_1 = arith.constant 0 : i32
    return %c0_i32, %c0_i32_0 : i32, i32
  }
  func.func @transform_10(%arg0: i32) -> (i32, i32) {
    %c0_i32 = arith.constant 0 : i32
    %c0_i32_0 = arith.constant 0 : i32
    %c0_i32_1 = arith.constant 0 : i32
    return %c0_i32, %c0_i32_0 : i32, i32
  }
  func.func @transform_11(%arg0: i32) -> (i32, i32) {
    %c0_i32 = arith.constant 0 : i32
    %c0_i32_0 = arith.constant 0 : i32
    %c0_i32_1 = arith.constant 0 : i32
    return %c0_i32, %c0_i32_0 : i32, i32
  }
  func.func @transform_12(%arg0: i32) -> (i32, i32) {
    %c0_i32 = arith.constant 0 : i32
    %c0_i32_0 = arith.constant 0 : i32
    %c0_i32_1 = arith.constant 0 : i32
    return %c0_i32, %c0_i32_0 : i32, i32
  }
  func.func @transform_13(%arg0: i32) -> (i32, i32, i32) {
    %c0_i32 = arith.constant 0 : i32
    %c0_i32_0 = arith.constant 0 : i32
    %c0_i32_1 = arith.constant 0 : i32
    return %arg0, %c0_i32, %c0_i32_0 : i32, i32, i32
  }
}

</mosaic_0001>

<llo_original>
// kernel: tpu_custom_call.1
$region0: #{tpu_custom_call.1}
  #allocation0 [shape = 'u32[]', space=smem, size = 0x4, offset = 0x4, fixed_abs, tag = 'smem constant byte address 0x4 - core index']
  #allocation1 [shape = 'u32[144,128]{1,0:T(1,128)}', space=vmem, size = 0x12000, scoped, tag = 'internal scratch']
  %s0 = inlined_call_operand.hbm [shape: bf16[2,16,128], index: 0, kind: input, shape index: {}]
  %s1 = inlined_call_operand.hbm [shape: bf16[2,8,128], index: 1, kind: input, shape index: {}]
  %s2 = inlined_call_operand.vmem [shape: bf16[2,16,8], index: 2, kind: input, shape index: {}]
  %s3 = inlined_call_operand.hbm [shape: bf16[2,16,16], index: 3, kind: input, shape index: {}]
  %s4 = inlined_call_operand.hbm [shape: bf16[2,8,8], index: 4, kind: input, shape index: {}]
  %s5 = inlined_call_operand.hbm [shape: bf16[2,8,16], index: 5, kind: input, shape index: {}]
  %s6 = inlined_call_operand.hbm [shape: f32[2,1,8], index: 6, kind: input, shape index: {}]
  %s7 = inlined_call_operand.hbm [shape: bf16[8,128], index: 7, kind: input, shape index: {}]
  %s8 = inlined_call_operand.hbm [shape: bf16[128,128], index: 8, kind: input, shape index: {}]
  %s9 = inlined_call_operand.hbm [shape: bf16[128,128], index: 9, kind: input, shape index: {}]
  %s10 = inlined_call_operand.hbm [shape: bf16[128,128], index: 10, kind: input, shape index: {}]
  %s11 = inlined_call_operand.vmem [shape: bf16[128,128], index: 11, kind: input, shape index: {}]
  %s12 = inlined_call_operand.vmem [shape: f32[1,128], index: 12, kind: input, shape index: {}]
  %s13 = inlined_call_operand.hbm [shape: f32[2,1,128], index: 13, kind: output, shape index: {}]
  %s14 = sld [smem:[#allocation0]]
  $region125: #{tpu_custom_call.1} parent=0
    _
  %s16 = ssub.s32 1, %s14
  %s17 = scalar_select 0, %s16, %s14
  $region1: #{tpu_custom_call.1} parent=0
    #allocation2 [shape = 'u8[8192]{0}', space=vmem, size = 0x2000, scoped, tag = 'input window, operand 0']
    #allocation3 [shape = 's32[2]{0}', space=sflag, size = 0x8, scoped, tag = 'scoped memory for tpu_custom_call.1']
    #allocation4 [shape = 's32[2]{0}', space=sflag, size = 0x8, scoped, tag = 'scoped memory for tpu_custom_call.1']
    #allocation5 [shape = 'u8[4096]{0}', space=vmem, size = 0x1000, scoped, tag = 'input window, operand 1']
    #allocation6 [shape = 's32[2]{0}', space=sflag, size = 0x8, scoped, tag = 'scoped memory for tpu_custom_call.1']
    #allocation7 [shape = 'u8[8192]{0}', space=vmem, size = 0x2000, scoped, tag = 'input window, operand 3']
    #allocation8 [shape = 'u8[4096]{0}', space=vmem, size = 0x1000, scoped, tag = 'input window, operand 4']
    #allocation9 [shape = 's32[2]{0}', space=sflag, size = 0x8, scoped, tag = 'scoped memory for tpu_custom_call.1']
    #allocation10 [shape = 'u8[4096]{0}', space=vmem, size = 0x1000, scoped, tag = 'input window, operand 5']
    #allocation11 [shape = 'u8[1024]{0}', space=vmem, size = 0x400, scoped, tag = 'input window, operand 6']
    #allocation12 [shape = 's32[2]{0}', space=sflag, size = 0x8, scoped, tag = 'scoped memory for tpu_custom_call.1']
    #allocation13 [shape = 'u8[2048]{0}', space=vmem, size = 0x800, scoped, tag = 'input window, operand 7, single buffered']
    #allocation14 [shape = 'u8[32768]{0}', space=vmem, size = 0x8000, scoped, tag = 'input window, operand 8, single buffered']
    #allocation15 [shape = 's32[1]{0}', space=sflag, size = 0x4, scoped, tag = 'scoped memory for tpu_custom_call.1']
    #allocation16 [shape = 'u8[32768]{0}', space=vmem, size = 0x8000, scoped, tag = 'input window, operand 9, single buffered']
    #allocation17 [shape = 'u8[32768]{0}', space=vmem, size = 0x8000, scoped, tag = 'input window, operand 10, single buffered']
    #allocation18 [shape = 's32[1]{0}', space=sflag, size = 0x4, scoped, tag = 'scoped memory for tpu_custom_call.1']
    #allocation19 [shape = 'u8[1024]{0}', space=vmem, size = 0x400, scoped, tag = 'output window, operand 0']
    %18 = vsyncpa [#allocation3], 0
    %s19 = scalar_lea.sflag [#allocation3], 1
    %20 = vsyncpa %s19, 0
    %21 = vsyncpa [#allocation6], 0
    %s22 = scalar_lea.sflag [#allocation6], 1
    %23 = vsyncpa %s22, 0
    %24 = vsyncpa [#allocation9], 0
    %s25 = scalar_lea.sflag [#allocation9], 1
    %26 = vsyncpa %s25, 0
    %27 = vsyncpa [#allocation12], 0
    %s28 = scalar_lea.sflag [#allocation12], 1
    %29 = vsyncpa %s28, 0
    %30 = vsyncpa [#allocation15], 0
    %31 = vsyncpa [#allocation18], 0
    %32 = vsyncpa [#allocation4], 0
    %s33 = scalar_lea.sflag [#allocation4], 1
    %34 = vsyncpa %s33, 0
    loop: start=0, step=1, limit=4
    $region2: #{tpu_custom_call.1} parent=1 // loop_pre_header
      _
    $region3: #{tpu_custom_call.1} parent=1 // loop_header
      %s36 = sphi 0, %s40
      %p37 = scmp.ge.s32.totalorder %s36, 4
      %s46 = sphi 0, %s48
      %s49 = sphi 0, %s46
      %s50 = sphi 0, %s49
      %s66 = sphi 0, %s50
      %s72 = sphi 0, %s74
      %s75 = sphi 0, %s72
      %s76 = sphi 0, %s75
      %s92 = sphi 0, %s76
      %s98 = sphi 0, %s100
      %s101 = sphi 0, %s98
      %s102 = sphi 0, %s101
      %s118 = sphi 0, %s102
      %s124 = sphi 0, %s126
      %s127 = sphi 0, %s124
      %s128 = sphi 0, %s127
      %s144 = sphi 0, %s128
      %s150 = sphi 0, %s152
      %s153 = sphi 0, %s150
      %s154 = sphi 0, %s153
      %s170 = sphi 0, %s154
      %s176 = sphi 0, %s178
      %s179 = sphi 0, %s176
      %s180 = sphi 0, %s179
      %s196 = sphi 0, %s180
      %s202 = sphi 0, %s204
      %s205 = sphi 0, %s202
      %s206 = sphi 0, %s205
      %s222 = sphi 0, %s206
      %s226 = sphi 0, %s226
      %s228 = sphi 0, %s226
      %s229 = sphi 0, %s228
      %s243 = sphi 0, %s229
      %s247 = sphi 0, %s247
      %s249 = sphi 0, %s247
      %s250 = sphi 0, %s249
      %s264 = sphi 0, %s250
      %s268 = sphi 0, %s268
      %s270 = sphi 0, %s268
      %s271 = sphi 0, %s270
      %s285 = sphi 0, %s271
      %s289 = sphi 0, %s289
      %s291 = sphi 0, %s289
      %s292 = sphi 0, %s291
      %s306 = sphi 0, %s292
      %s310 = sphi 0, %s310
      %s312 = sphi 0, %s310
      %s313 = sphi 0, %s312
      %s327 = sphi 0, %s313
      %s331 = sphi 0, %s331
      %s333 = sphi 0, %s331
      %s334 = sphi 0, %s333
      %s348 = sphi 0, %s334
      %s354 = sphi 0, %s356
      %s357 = sphi 0, %s354
      %s358 = sphi 0, %s357
      %s374 = sphi 0, %s358
    $region4: #{tpu_custom_call.1} parent=1 // loop_header_branch
      %39 = sbr.rel (%p37) target = $region8
    $region5: #{tpu_custom_call.1} parent=1 // loop_body
      %s41 = ssub.s32 %s36, 1
      %s42 = ssub.s32 %s36, 2
      %s43 = sadd.s32 %s36, 1
      %s44 = ssub.s32 %s36, %s43
      %p45 = scmp.eq.s32.totalorder %s44, 0
      %s47 = sadd.s32 %s46, 1
      %s48 = scalar_select %p45, %s46, %s47
      %p51 = pneg %p45
      %p52 = scmp.eq.s32.totalorder %s36, 1
      %p53 = por %p51, %p52
      %p54 = scmp.ne.s32.totalorder %s46, %s49
      %p55 = scmp.eq.s32.totalorder %s36, 0
      %p56 = por %p54, %p55
      %p57 = scmp.ne.s32.totalorder %s46, %s49
      %p58 = scmp.eq.s32.totalorder %s41, 1
      %p59 = por %p57, %p58
      %p60 = scmp.ne.s32.totalorder %s49, %s50
      %p61 = scmp.eq.s32.totalorder %s41, 0
      %p62 = por %p60, %p61
      %p63 = scmp.ne.s32.totalorder %s49, %s50
      %p64 = scmp.eq.s32.totalorder %s42, 1
      %p65 = por %p63, %p64
      %p67 = scmp.ne.s32.totalorder %s50, %s66
      %p68 = scmp.eq.s32.totalorder %s42, 0
      %p69 = por %p67, %p68
      %s70 = ssub.s32 %s36, %s43
      %p71 = scmp.eq.s32.totalorder %s70, 0
      %s73 = sadd.s32 %s72, 1
      %s74 = scalar_select %p71, %s72, %s73
      %p77 = pneg %p71
      %p78 = scmp.eq.s32.totalorder %s36, 1
      %p79 = por %p77, %p78
      %p80 = scmp.ne.s32.totalorder %s72, %s75
      %p81 = scmp.eq.s32.totalorder %s36, 0
      %p82 = por %p80, %p81
      %p83 = scmp.ne.s32.totalorder %s72, %s75
      %p84 = scmp.eq.s32.totalorder %s41, 1
      %p85 = por %p83, %p84
      %p86 = scmp.ne.s32.totalorder %s75, %s76
      %p87 = scmp.eq.s32.totalorder %s41, 0
      %p88 = por %p86, %p87
      %p89 = scmp.ne.s32.totalorder %s75, %s76
      %p90 = scmp.eq.s32.totalorder %s42, 1
      %p91 = por %p89, %p90
      %p93 = scmp.ne.s32.totalorder %s76, %s92
      %p94 = scmp.eq.s32.totalorder %s42, 0
      %p95 = por %p93, %p94
      %s96 = ssub.s32 %s36, %s43
      %p97 = scmp.eq.s32.totalorder %s96, 0
      %s99 = sadd.s32 %s98, 1
      %s100 = scalar_select %p97, %s98, %s99
      %p103 = pneg %p97
      %p104 = scmp.eq.s32.totalorder %s36, 1
      %p105 = por %p103, %p104
      %p106 = scmp.ne.s32.totalorder %s98, %s101
      %p107 = scmp.eq.s32.totalorder %s36, 0
      %p108 = por %p106, %p107
      %p109 = scmp.ne.s32.totalorder %s98, %s101
      %p110 = scmp.eq.s32.totalorder %s41, 1
      %p111 = por %p109, %p110
      %p112 = scmp.ne.s32.totalorder %s101, %s102
      %p113 = scmp.eq.s32.totalorder %s41, 0
      %p114 = por %p112, %p113
      %p115 = scmp.ne.s32.totalorder %s101, %s102
      %p116 = scmp.eq.s32.totalorder %s42, 1
      %p117 = por %p115, %p116
      %p119 = scmp.ne.s32.totalorder %s102, %s118
      %p120 = scmp.eq.s32.totalorder %s42, 0
      %p121 = por %p119, %p120
      %s122 = ssub.s32 %s36, %s43
      %p123 = scmp.eq.s32.totalorder %s122, 0
      %s125 = sadd.s32 %s124, 1
      %s126 = scalar_select %p123, %s124, %s125
      %p129 = pneg %p123
      %p130 = scmp.eq.s32.totalorder %s36, 1
      %p131 = por %p129, %p130
      %p132 = scmp.ne.s32.totalorder %s124, %s127
      %p133 = scmp.eq.s32.totalorder %s36, 0
      %p134 = por %p132, %p133
      %p135 = scmp.ne.s32.totalorder %s124, %s127
      %p136 = scmp.eq.s32.totalorder %s41, 1
      %p137 = por %p135, %p136
      %p138 = scmp.ne.s32.totalorder %s127, %s128
      %p139 = scmp.eq.s32.totalorder %s41, 0
      %p140 = por %p138, %p139
      %p141 = scmp.ne.s32.totalorder %s127, %s128
      %p142 = scmp.eq.s32.totalorder %s42, 1
      %p143 = por %p141, %p142
      %p145 = scmp.ne.s32.totalorder %s128, %s144
      %p146 = scmp.eq.s32.totalorder %s42, 0
      %p147 = por %p145, %p146
      %s148 = ssub.s32 %s36, %s43
      %p149 = scmp.eq.s32.totalorder %s148, 0
      %s151 = sadd.s32 %s150, 1
      %s152 = scalar_select %p149, %s150, %s151
      %p155 = pneg %p149
      %p156 = scmp.eq.s32.totalorder %s36, 1
      %p157 = por %p155, %p156
      %p158 = scmp.ne.s32.totalorder %s150, %s153
      %p159 = scmp.eq.s32.totalorder %s36, 0
      %p160 = por %p158, %p159
      %p161 = scmp.ne.s32.totalorder %s150, %s153
      %p162 = scmp.eq.s32.totalorder %s41, 1
      %p163 = por %p161, %p162
      %p164 = scmp.ne.s32.totalorder %s153, %s154
      %p165 = scmp.eq.s32.totalorder %s41, 0
      %p166 = por %p164, %p165
      %p167 = scmp.ne.s32.totalorder %s153, %s154
      %p168 = scmp.eq.s32.totalorder %s42, 1
      %p169 = por %p167, %p168
      %p171 = scmp.ne.s32.totalorder %s154, %s170
      %p172 = scmp.eq.s32.totalorder %s42, 0
      %p173 = por %p171, %p172
      %s174 = ssub.s32 %s36, %s43
      %p175 = scmp.eq.s32.totalorder %s174, 0
      %s177 = sadd.s32 %s176, 1
      %s178 = scalar_select %p175, %s176, %s177
      %p181 = pneg %p175
      %p182 = scmp.eq.s32.totalorder %s36, 1
      %p183 = por %p181, %p182
      %p184 = scmp.ne.s32.totalorder %s176, %s179
      %p185 = scmp.eq.s32.totalorder %s36, 0
      %p186 = por %p184, %p185
      %p187 = scmp.ne.s32.totalorder %s176, %s179
      %p188 = scmp.eq.s32.totalorder %s41, 1
      %p189 = por %p187, %p188
      %p190 = scmp.ne.s32.totalorder %s179, %s180
      %p191 = scmp.eq.s32.totalorder %s41, 0
      %p192 = por %p190, %p191
      %p193 = scmp.ne.s32.totalorder %s179, %s180
      %p194 = scmp.eq.s32.totalorder %s42, 1
      %p195 = por %p193, %p194
      %p197 = scmp.ne.s32.totalorder %s180, %s196
      %p198 = scmp.eq.s32.totalorder %s42, 0
      %p199 = por %p197, %p198
      %s200 = ssub.s32 %s36, %s43
      %p201 = scmp.eq.s32.totalorder %s200, 0
      %s203 = sadd.s32 %s202, 1
      %s204 = scalar_select %p201, %s202, %s203
      %p207 = pneg %p201
      %p208 = scmp.eq.s32.totalorder %s36, 1
      %p209 = por %p207, %p208
      %p210 = scmp.ne.s32.totalorder %s202, %s205
      %p211 = scmp.eq.s32.totalorder %s36, 0
      %p212 = por %p210, %p211
      %p213 = scmp.ne.s32.totalorder %s202, %s205
      %p214 = scmp.eq.s32.totalorder %s41, 1
      %p215 = por %p213, %p214
      %p216 = scmp.ne.s32.totalorder %s205, %s206
      %p217 = scmp.eq.s32.totalorder %s41, 0
      %p218 = por %p216, %p217
      %p219 = scmp.ne.s32.totalorder %s205, %s206
      %p220 = scmp.eq.s32.totalorder %s42, 1
      %p221 = por %p219, %p220
      %p223 = scmp.ne.s32.totalorder %s206, %s222
      %p224 = scmp.eq.s32.totalorder %s42, 0
      %p225 = por %p223, %p224
      %s227 = sadd.s32 %s226, 1
      %p230 = scmp.eq.s32.totalorder %s36, 1
      %p231 = scmp.ne.s32.totalorder %s226, %s228
      %p232 = scmp.eq.s32.totalorder %s36, 0
      %p233 = por %p231, %p232
      %p234 = scmp.ne.s32.totalorder %s226, %s228
      %p235 = scmp.eq.s32.totalorder %s41, 1
      %p236 = por %p234, %p235
      %p237 = scmp.ne.s32.totalorder %s228, %s229
      %p238 = scmp.eq.s32.totalorder %s41, 0
      %p239 = por %p237, %p238
      %p240 = scmp.ne.s32.totalorder %s228, %s229
      %p241 = scmp.eq.s32.totalorder %s42, 1
      %p242 = por %p240, %p241
      %p244 = scmp.ne.s32.totalorder %s229, %s243
      %p245 = scmp.eq.s32.totalorder %s42, 0
      %p246 = por %p244, %p245
      %s248 = sadd.s32 %s247, 1
      %p251 = scmp.eq.s32.totalorder %s36, 1
      %p252 = scmp.ne.s32.totalorder %s247, %s249
      %p253 = scmp.eq.s32.totalorder %s36, 0
      %p254 = por %p252, %p253
      %p255 = scmp.ne.s32.totalorder %s247, %s249
      %p256 = scmp.eq.s32.totalorder %s41, 1
      %p257 = por %p255, %p256
      %p258 = scmp.ne.s32.totalorder %s249, %s250
      %p259 = scmp.eq.s32.totalorder %s41, 0
      %p260 = por %p258, %p259
      %p261 = scmp.ne.s32.totalorder %s249, %s250
      %p262 = scmp.eq.s32.totalorder %s42, 1
      %p263 = por %p261, %p262
      %p265 = scmp.ne.s32.totalorder %s250, %s264
      %p266 = scmp.eq.s32.totalorder %s42, 0
      %p267 = por %p265, %p266
      %s269 = sadd.s32 %s268, 1
      %p272 = scmp.eq.s32.totalorder %s36, 1
      %p273 = scmp.ne.s32.totalorder %s268, %s270
      %p274 = scmp.eq.s32.totalorder %s36, 0
      %p275 = por %p273, %p274
      %p276 = scmp.ne.s32.totalorder %s268, %s270
      %p277 = scmp.eq.s32.totalorder %s41, 1
      %p278 = por %p276, %p277
      %p279 = scmp.ne.s32.totalorder %s270, %s271
      %p280 = scmp.eq.s32.totalorder %s41, 0
      %p281 = por %p279, %p280
      %p282 = scmp.ne.s32.totalorder %s270, %s271
      %p283 = scmp.eq.s32.totalorder %s42, 1
      %p284 = por %p282, %p283
      %p286 = scmp.ne.s32.totalorder %s271, %s285
      %p287 = scmp.eq.s32.totalorder %s42, 0
      %p288 = por %p286, %p287
      %s290 = sadd.s32 %s289, 1
      %p293 = scmp.eq.s32.totalorder %s36, 1
      %p294 = scmp.ne.s32.totalorder %s289, %s291
      %p295 = scmp.eq.s32.totalorder %s36, 0
      %p296 = por %p294, %p295
      %p297 = scmp.ne.s32.totalorder %s289, %s291
      %p298 = scmp.eq.s32.totalorder %s41, 1
      %p299 = por %p297, %p298
      %p300 = scmp.ne.s32.totalorder %s291, %s292
      %p301 = scmp.eq.s32.totalorder %s41, 0
      %p302 = por %p300, %p301
      %p303 = scmp.ne.s32.totalorder %s291, %s292
      %p304 = scmp.eq.s32.totalorder %s42, 1
      %p305 = por %p303, %p304
      %p307 = scmp.ne.s32.totalorder %s292, %s306
      %p308 = scmp.eq.s32.totalorder %s42, 0
      %p309 = por %p307, %p308
      %s311 = sadd.s32 %s310, 1
      %p314 = scmp.eq.s32.totalorder %s36, 1
      %p315 = scmp.ne.s32.totalorder %s310, %s312
      %p316 = scmp.eq.s32.totalorder %s36, 0
      %p317 = por %p315, %p316
      %p318 = scmp.ne.s32.totalorder %s310, %s312
      %p319 = scmp.eq.s32.totalorder %s41, 1
      %p320 = por %p318, %p319
      %p321 = scmp.ne.s32.totalorder %s312, %s313
      %p322 = scmp.eq.s32.totalorder %s41, 0
      %p323 = por %p321, %p322
      %p324 = scmp.ne.s32.totalorder %s312, %s313
      %p325 = scmp.eq.s32.totalorder %s42, 1
      %p326 = por %p324, %p325
      %p328 = scmp.ne.s32.totalorder %s313, %s327
      %p329 = scmp.eq.s32.totalorder %s42, 0
      %p330 = por %p328, %p329
      %s332 = sadd.s32 %s331, 1
      %p335 = scmp.eq.s32.totalorder %s36, 1
      %p336 = scmp.ne.s32.totalorder %s331, %s333
      %p337 = scmp.eq.s32.totalorder %s36, 0
      %p338 = por %p336, %p337
      %p339 = scmp.ne.s32.totalorder %s331, %s333
      %p340 = scmp.eq.s32.totalorder %s41, 1
      %p341 = por %p339, %p340
      %p342 = scmp.ne.s32.totalorder %s333, %s334
      %p343 = scmp.eq.s32.totalorder %s41, 0
      %p344 = por %p342, %p343
      %p345 = scmp.ne.s32.totalorder %s333, %s334
      %p346 = scmp.eq.s32.totalorder %s42, 1
      %p347 = por %p345, %p346
      %p349 = scmp.ne.s32.totalorder %s334, %s348
      %p350 = scmp.eq.s32.totalorder %s42, 0
      %p351 = por %p349, %p350
      %s352 = ssub.s32 %s36, %s43
      %p353 = scmp.eq.s32.totalorder %s352, 0
      %s355 = sadd.s32 %s354, 1
      %s356 = scalar_select %p353, %s354, %s355
      %p359 = pneg %p353
      %p360 = scmp.eq.s32.totalorder %s36, 1
      %p361 = por %p359, %p360
      %p362 = scmp.ne.s32.totalorder %s354, %s357
      %p363 = scmp.eq.s32.totalorder %s36, 0
      %p364 = por %p362, %p363
      %p365 = scmp.ne.s32.totalorder %s354, %s357
      %p366 = scmp.eq.s32.totalorder %s41, 1
      %p367 = por %p365, %p366
      %p368 = scmp.ne.s32.totalorder %s357, %s358
      %p369 = scmp.eq.s32.totalorder %s41, 0
      %p370 = por %p368, %p369
      %p371 = scmp.ne.s32.totalorder %s357, %s358
      %p372 = scmp.eq.s32.totalorder %s42, 1
      %p373 = por %p371, %p372
      %p375 = scmp.ne.s32.totalorder %s358, %s374
      %p376 = scmp.eq.s32.totalorder %s42, 0
      %p377 = por %p375, %p376
      %p378 = scmp.le.s32.totalorder 1, %s36
      %p379 = scmp.lt.s32.totalorder %s36, 3
      %p380 = pnand %p378, %p379
      %p381 = pneg %p380
      // Predicated region
      $region9: #{tpu_custom_call.1} parent=5 // pred_check
        _
      $region10: #{tpu_custom_call.1} parent=5 // pred_check_branch
        %383 = sbr.rel (%p380) target = $region12
      $region11: #{tpu_custom_call.1} parent=5 // pred_region
        %s384 = ssub.s32 %s36, 1
        // Predicated region
        $region13: #{tpu_custom_call.1} parent=11 // pred_check
          %p385 = pneg %p239
        $region14: #{tpu_custom_call.1} parent=11 // pred_check_branch
          %387 = sbr.rel (%p385) target = $region16
        $region15: #{tpu_custom_call.1} parent=11 // pred_region
          %s389 = ssub.s32 64, 64
          %390 = vsyncadd [#allocation12], %s389
          %s392 = sshll.u32 [#allocation13], 4
          %s393 = int_to_ptr.vmem [resolvable:$true] %s392
          %395 = dma.hbm_to_vmem [thread:$0]  %s7, 64, %s393, [#allocation12]
        $region16: #{tpu_custom_call.1} parent=11 // pred_fallthru
          _
        // Predicated region
        $region17: #{tpu_custom_call.1} parent=11 // pred_check
          %p396 = pneg %p260
        $region18: #{tpu_custom_call.1} parent=11 // pred_check_branch
          %398 = sbr.rel (%p396) target = $region20
        $region19: #{tpu_custom_call.1} parent=11 // pred_region
          %s400 = ssub.s32 1024, 1024
          %401 = vsyncadd [#allocation15], %s400
          %s402 = sshll.u32 [#allocation14], 4
          %s403 = int_to_ptr.vmem [resolvable:$true] %s402
          %408 = dma.hbm_to_vmem [thread:$0]  %s8, 1024, %s403, [#allocation15], 64, 64, 4
        $region20: #{tpu_custom_call.1} parent=11 // pred_fallthru
          _
        // Predicated region
        $region21: #{tpu_custom_call.1} parent=11 // pred_check
          %p409 = pneg %p281
        $region22: #{tpu_custom_call.1} parent=11 // pred_check_branch
          %411 = sbr.rel (%p409) target = $region24
        $region23: #{tpu_custom_call.1} parent=11 // pred_region
          %s413 = ssub.s32 1024, 1024
          %414 = vsyncadd [#allocation15], %s413
          %s415 = sshll.u32 [#allocation16], 4
          %s416 = int_to_ptr.vmem [resolvable:$true] %s415
          %421 = dma.hbm_to_vmem [thread:$0]  %s9, 1024, %s416, [#allocation15], 64, 64, 4
        $region24: #{tpu_custom_call.1} parent=11 // pred_fallthru
          _
        // Predicated region
        $region25: #{tpu_custom_call.1} parent=11 // pred_check
          %p422 = pneg %p302
        $region26: #{tpu_custom_call.1} parent=11 // pred_check_branch
          %424 = sbr.rel (%p422) target = $region28
        $region27: #{tpu_custom_call.1} parent=11 // pred_region
          %s426 = ssub.s32 1024, 1024
          %427 = vsyncadd [#allocation18], %s426
          %s428 = sshll.u32 [#allocation17], 4
          %s429 = int_to_ptr.vmem [resolvable:$true] %s428
          %434 = dma.hbm_to_vmem [thread:$0]  %s10, 1024, %s429, [#allocation18], 64, 64, 4
        $region28: #{tpu_custom_call.1} parent=11 // pred_fallthru
          _
        // Predicated region
        $region29: #{tpu_custom_call.1} parent=11 // pred_check
          %p435 = pneg %p323
        $region30: #{tpu_custom_call.1} parent=11 // pred_check_branch
          %437 = sbr.rel (%p435) target = $region32
        $region31: #{tpu_custom_call.1} parent=11 // pred_region
          _
        $region32: #{tpu_custom_call.1} parent=11 // pred_fallthru
          _
        // Predicated region
        $region33: #{tpu_custom_call.1} parent=11 // pred_check
          %p438 = pneg %p344
        $region34: #{tpu_custom_call.1} parent=11 // pred_check_branch
          %440 = sbr.rel (%p438) target = $region36
        $region35: #{tpu_custom_call.1} parent=11 // pred_region
          _
        $region36: #{tpu_custom_call.1} parent=11 // pred_fallthru
          _
      $region12: #{tpu_custom_call.1} parent=5 // pred_fallthru
        _
      %p441 = scmp.lt.s32.totalorder %s36, 2
      // Predicated region
      $region37: #{tpu_custom_call.1} parent=5 // pred_check
        %p442 = pneg %p441
      $region38: #{tpu_custom_call.1} parent=5 // pred_check_branch
        %444 = sbr.rel (%p442) target = $region40
      $region39: #{tpu_custom_call.1} parent=5 // pred_region
        // Predicated region
        $region41: #{tpu_custom_call.1} parent=39 // pred_check
          %p445 = pneg %p56
        $region42: #{tpu_custom_call.1} parent=39 // pred_check_branch
          %447 = sbr.rel (%p445) target = $region44
        $region43: #{tpu_custom_call.1} parent=39 // pred_region
          %s448 = sand.u32 %s46, 1
          %s449 = scalar_lea.sflag [#allocation3], %s448
          %s450 = sand.u32 %s46, 1
          %s451 = smul.addr %s450, 8
          %s452 = scalar_lea.vmem [#allocation2], %s451
          %s454 = ssub.s32 128, 128
          %455 = vsyncadd %s449, %s454
          %s456 = smul.addr %s36, 2
          %s457 = smul.addr %s456, 64
          %s458 = scalar_lea.hbm %s0, %s457
          %s459 = sshll.u32 %s452, 4
          %s460 = int_to_ptr.vmem [resolvable:$true] %s459
          %465 = dma.hbm_to_vmem [thread:$0]  %s458, 128, %s460, %s449, 64, 64, 4
        $region44: #{tpu_custom_call.1} parent=39 // pred_fallthru
          _
        // Predicated region
        $region45: #{tpu_custom_call.1} parent=39 // pred_check
          %p466 = pneg %p82
        $region46: #{tpu_custom_call.1} parent=39 // pred_check_branch
          %468 = sbr.rel (%p466) target = $region48
        $region47: #{tpu_custom_call.1} parent=39 // pred_region
          %s469 = sand.u32 %s36, 1
          %s470 = scalar_lea.sflag [#allocation6], %s469
          %s471 = sand.u32 %s72, 1
          %s472 = smul.addr %s471, 4
          %s473 = scalar_lea.vmem [#allocation5], %s472
          %s475 = ssub.s32 64, 64
          %476 = vsyncadd %s470, %s475
          %s477 = smul.addr %s36, 64
          %s478 = scalar_lea.hbm %s1, %s477
          %s480 = sshll.u32 %s473, 4
          %s481 = int_to_ptr.vmem [resolvable:$true] %s480
          %483 = dma.hbm_to_vmem [thread:$0]  %s478, 64, %s481, %s470
        $region48: #{tpu_custom_call.1} parent=39 // pred_fallthru
          _
        // Predicated region
        $region49: #{tpu_custom_call.1} parent=39 // pred_check
          %p484 = pneg %p108
        $region50: #{tpu_custom_call.1} parent=39 // pred_check_branch
          %486 = sbr.rel (%p484) target = $region52
        $region51: #{tpu_custom_call.1} parent=39 // pred_region
          %p487 = scmp.lt.s32.totalorder %s36, 1
          %s488 = scalar_select %p487, %s36, 1
          %s489 = smul.addr %s488, 2
          %s490 = smul.addr %s489, 4
          %s491 = scalar_lea.vmem %s2, %s490
        $region52: #{tpu_custom_call.1} parent=39 // pred_fallthru
          _
        // Predicated region
        $region53: #{tpu_custom_call.1} parent=39 // pred_check
          %p492 = pneg %p134
        $region54: #{tpu_custom_call.1} parent=39 // pred_check_branch
          %494 = sbr.rel (%p492) target = $region56
        $region55: #{tpu_custom_call.1} parent=39 // pred_region
          %s495 = sand.u32 %s36, 1
          %s496 = scalar_lea.sflag [#allocation6], %s495
          %s497 = sand.u32 %s124, 1
          %s498 = smul.addr %s497, 8
          %s499 = scalar_lea.vmem [#allocation7], %s498
          %s501 = ssub.s32 128, 128
          %502 = vsyncadd %s496, %s501
          %s503 = smul.addr %s36, 2
          %s504 = smul.addr %s503, 64
          %s505 = scalar_lea.hbm %s3, %s504
          %s506 = sshll.u32 %s499, 4
          %s507 = int_to_ptr.vmem [resolvable:$true] %s506
          %512 = dma.hbm_to_vmem [thread:$0]  %s505, 128, %s507, %s496, 64, 64, 4
        $region56: #{tpu_custom_call.1} parent=39 // pred_fallthru
          _
        // Predicated region
        $region57: #{tpu_custom_call.1} parent=39 // pred_check
          %p513 = pneg %p160
        $region58: #{tpu_custom_call.1} parent=39 // pred_check_branch
          %515 = sbr.rel (%p513) target = $region60
        $region59: #{tpu_custom_call.1} parent=39 // pred_region
          %s516 = sand.u32 %s36, 1
          %s517 = scalar_lea.sflag [#allocation9], %s516
          %s518 = sand.u32 %s150, 1
          %s519 = smul.addr %s518, 4
          %s520 = scalar_lea.vmem [#allocation8], %s519
          %s522 = ssub.s32 64, 64
          %523 = vsyncadd %s517, %s522
          %s524 = smul.addr %s36, 64
          %s525 = scalar_lea.hbm %s4, %s524
          %s527 = sshll.u32 %s520, 4
          %s528 = int_to_ptr.vmem [resolvable:$true] %s527
          %530 = dma.hbm_to_vmem [thread:$0]  %s525, 64, %s528, %s517
        $region60: #{tpu_custom_call.1} parent=39 // pred_fallthru
          _
        // Predicated region
        $region61: #{tpu_custom_call.1} parent=39 // pred_check
          %p531 = pneg %p186
        $region62: #{tpu_custom_call.1} parent=39 // pred_check_branch
          %533 = sbr.rel (%p531) target = $region64
        $region63: #{tpu_custom_call.1} parent=39 // pred_region
          %s534 = sand.u32 %s36, 1
          %s535 = scalar_lea.sflag [#allocation9], %s534
          %s536 = sand.u32 %s176, 1
          %s537 = smul.addr %s536, 4
          %s538 = scalar_lea.vmem [#allocation10], %s537
          %s540 = ssub.s32 64, 64
          %541 = vsyncadd %s535, %s540
          %s542 = smul.addr %s36, 64
          %s543 = scalar_lea.hbm %s5, %s542
          %s545 = sshll.u32 %s538, 4
          %s546 = int_to_ptr.vmem [resolvable:$true] %s545
          %548 = dma.hbm_to_vmem [thread:$0]  %s543, 64, %s546, %s535
        $region64: #{tpu_custom_call.1} parent=39 // pred_fallthru
          _
        // Predicated region
        $region65: #{tpu_custom_call.1} parent=39 // pred_check
          %p549 = pneg %p212
        $region66: #{tpu_custom_call.1} parent=39 // pred_check_branch
          %551 = sbr.rel (%p549) target = $region68
        $region67: #{tpu_custom_call.1} parent=39 // pred_region
          %s552 = sand.u32 %s36, 1
          %s553 = scalar_lea.sflag [#allocation12], %s552
          %s554 = sand.u32 %s202, 1
          %s555 = scalar_lea.vmem [#allocation11], %s554
          %s557 = ssub.s32 16, 16
          %558 = vsyncadd %s553, %s557
          %s559 = smul.addr %s36, 16
          %s560 = scalar_lea.hbm %s6, %s559
          %s562 = sshll.u32 %s555, 4
          %s563 = int_to_ptr.vmem [resolvable:$true] %s562
          %565 = dma.hbm_to_vmem [thread:$0]  %s560, 16, %s563, %s553
        $region68: #{tpu_custom_call.1} parent=39 // pred_fallthru
          _
      $region40: #{tpu_custom_call.1} parent=5 // pred_fallthru
        _
      %p566 = scmp.le.s32.totalorder 1, %s36
      %p567 = scmp.lt.s32.totalorder %s36, 3
      %p568 = pnand %p566, %p567
      %p569 = pneg %p568
      // Predicated region
      $region69: #{tpu_custom_call.1} parent=5 // pred_check
        _
      $region70: #{tpu_custom_call.1} parent=5 // pred_check_branch
        %571 = sbr.rel (%p568) target = $region72
      $region71: #{tpu_custom_call.1} parent=5 // pred_region
        %s572 = ssub.s32 %s36, 1
        %s573 = sand.u32 %s49, 1
        %s574 = scalar_lea.sflag [#allocation3], %s573
        %s575 = sand.u32 %s49, 1
        %s576 = smul.addr %s575, 8
        %s577 = scalar_lea.vmem [#allocation2], %s576
        // Predicated region
        $region73: #{tpu_custom_call.1} parent=71 // pred_check
          %p578 = pneg %p62
        $region74: #{tpu_custom_call.1} parent=71 // pred_check_branch
          %580 = sbr.rel (%p578) target = $region76
        $region75: #{tpu_custom_call.1} parent=71 // pred_region
          %581 = dma.done %s574, 128
        $region76: #{tpu_custom_call.1} parent=71 // pred_fallthru
          _
        %s582 = sand.u32 %s41, 1
        %s583 = scalar_lea.sflag [#allocation6], %s582
        %s584 = sand.u32 %s75, 1
        %s585 = smul.addr %s584, 4
        %s586 = scalar_lea.vmem [#allocation5], %s585
        // Predicated region
        $region77: #{tpu_custom_call.1} parent=71 // pred_check
          %p587 = pneg %p88
        $region78: #{tpu_custom_call.1} parent=71 // pred_check_branch
          %589 = sbr.rel (%p587) target = $region80
        $region79: #{tpu_custom_call.1} parent=71 // pred_region
          %590 = dma.done %s583, 64
        $region80: #{tpu_custom_call.1} parent=71 // pred_fallthru
          _
        %s591 = sand.u32 %s41, 1
        %s592 = scalar_lea.sflag [#allocation6], %s591
        %s593 = sand.u32 %s127, 1
        %s594 = smul.addr %s593, 8
        %s595 = scalar_lea.vmem [#allocation7], %s594
        // Predicated region
        $region81: #{tpu_custom_call.1} parent=71 // pred_check
          %p596 = pneg %p140
        $region82: #{tpu_custom_call.1} parent=71 // pred_check_branch
          %598 = sbr.rel (%p596) target = $region84
        $region83: #{tpu_custom_call.1} parent=71 // pred_region
          %599 = dma.done %s592, 128
        $region84: #{tpu_custom_call.1} parent=71 // pred_fallthru
          _
        %s600 = sand.u32 %s41, 1
        %s601 = scalar_lea.sflag [#allocation9], %s600
        %s602 = sand.u32 %s153, 1
        %s603 = smul.addr %s602, 4
        %s604 = scalar_lea.vmem [#allocation8], %s603
        // Predicated region
        $region85: #{tpu_custom_call.1} parent=71 // pred_check
          %p605 = pneg %p166
        $region86: #{tpu_custom_call.1} parent=71 // pred_check_branch
          %607 = sbr.rel (%p605) target = $region88
        $region87: #{tpu_custom_call.1} parent=71 // pred_region
          %608 = dma.done %s601, 64
        $region88: #{tpu_custom_call.1} parent=71 // pred_fallthru
          _
        %s609 = sand.u32 %s41, 1
        %s610 = scalar_lea.sflag [#allocation9], %s609
        %s611 = sand.u32 %s179, 1
        %s612 = smul.addr %s611, 4
        %s613 = scalar_lea.vmem [#allocation10], %s612
        // Predicated region
        $region89: #{tpu_custom_call.1} parent=71 // pred_check
          %p614 = pneg %p192
        $region90: #{tpu_custom_call.1} parent=71 // pred_check_branch
          %616 = sbr.rel (%p614) target = $region92
        $region91: #{tpu_custom_call.1} parent=71 // pred_region
          %617 = dma.done %s610, 64
        $region92: #{tpu_custom_call.1} parent=71 // pred_fallthru
          _
        %s618 = sand.u32 %s41, 1
        %s619 = scalar_lea.sflag [#allocation12], %s618
        %s620 = sand.u32 %s205, 1
        %s621 = scalar_lea.vmem [#allocation11], %s620
        // Predicated region
        $region93: #{tpu_custom_call.1} parent=71 // pred_check
          %p622 = pneg %p218
        $region94: #{tpu_custom_call.1} parent=71 // pred_check_branch
          %624 = sbr.rel (%p622) target = $region96
        $region95: #{tpu_custom_call.1} parent=71 // pred_region
          %625 = dma.done %s619, 16
        $region96: #{tpu_custom_call.1} parent=71 // pred_fallthru
          _
        // Predicated region
        $region97: #{tpu_custom_call.1} parent=71 // pred_check
          %p626 = pneg %p239
        $region98: #{tpu_custom_call.1} parent=71 // pred_check_branch
          %628 = sbr.rel (%p626) target = $region100
        $region99: #{tpu_custom_call.1} parent=71 // pred_region
          %629 = dma.done [#allocation12], 64
        $region100: #{tpu_custom_call.1} parent=71 // pred_fallthru
          _
        // Predicated region
        $region101: #{tpu_custom_call.1} parent=71 // pred_check
          %p630 = pneg %p260
        $region102: #{tpu_custom_call.1} parent=71 // pred_check_branch
          %632 = sbr.rel (%p630) target = $region104
        $region103: #{tpu_custom_call.1} parent=71 // pred_region
          %633 = dma.done [#allocation15], 1024
        $region104: #{tpu_custom_call.1} parent=71 // pred_fallthru
          _
        // Predicated region
        $region105: #{tpu_custom_call.1} parent=71 // pred_check
          %p634 = pneg %p281
        $region106: #{tpu_custom_call.1} parent=71 // pred_check_branch
          %636 = sbr.rel (%p634) target = $region108
        $region107: #{tpu_custom_call.1} parent=71 // pred_region
          %637 = dma.done [#allocation15], 1024
        $region108: #{tpu_custom_call.1} parent=71 // pred_fallthru
          _
        // Predicated region
        $region109: #{tpu_custom_call.1} parent=71 // pred_check
          %p638 = pneg %p302
        $region110: #{tpu_custom_call.1} parent=71 // pred_check_branch
          %640 = sbr.rel (%p638) target = $region112
        $region111: #{tpu_custom_call.1} parent=71 // pred_region
          %641 = dma.done [#allocation18], 1024
        $region112: #{tpu_custom_call.1} parent=71 // pred_fallthru
          _
        %s642 = sand.u32 %s49, 1
        %s643 = scalar_lea.sflag [#allocation3], %s642
        %s644 = sand.u32 %s49, 1
        %s645 = smul.addr %s644, 8
        %s646 = scalar_lea.vmem [#allocation2], %s645
        %p647 = pneg %p62
        %p648 = pneg %p59
        %s649 = sand.u32 %s41, 1
        %s650 = scalar_lea.sflag [#allocation6], %s649
        %s651 = sand.u32 %s75, 1
        %s652 = smul.addr %s651, 4
        %s653 = scalar_lea.vmem [#allocation5], %s652
        %p654 = pneg %p88
        %p655 = pneg %p85
        %p656 = scmp.lt.s32.totalorder %s41, 1
        %s657 = scalar_select %p656, %s41, 1
        %s658 = smul.addr %s657, 2
        %s659 = smul.addr %s658, 4
        %s660 = scalar_lea.vmem %s2, %s659
        %p661 = pneg %p114
        %p662 = pneg %p111
        %s663 = sand.u32 %s41, 1
        %s664 = scalar_lea.sflag [#allocation6], %s663
        %s665 = sand.u32 %s127, 1
        %s666 = smul.addr %s665, 8
        %s667 = scalar_lea.vmem [#allocation7], %s666
        %p668 = pneg %p140
        %p669 = pneg %p137
        %s670 = sand.u32 %s41, 1
        %s671 = scalar_lea.sflag [#allocation9], %s670
        %s672 = sand.u32 %s153, 1
        %s673 = smul.addr %s672, 4
        %s674 = scalar_lea.vmem [#allocation8], %s673
        %p675 = pneg %p166
        %p676 = pneg %p163
        %s677 = sand.u32 %s41, 1
        %s678 = scalar_lea.sflag [#allocation9], %s677
        %s679 = sand.u32 %s179, 1
        %s680 = smul.addr %s679, 4
        %s681 = scalar_lea.vmem [#allocation10], %s680
        %p682 = pneg %p192
        %p683 = pneg %p189
        %s684 = sand.u32 %s41, 1
        %s685 = scalar_lea.sflag [#allocation12], %s684
        %s686 = sand.u32 %s205, 1
        %s687 = scalar_lea.vmem [#allocation11], %s686
        %p688 = pneg %p218
        %p689 = pneg %p215
        %p690 = pneg %p239
        %p691 = pneg %p236
        %p692 = pneg %p260
        %p693 = pneg %p257
        %p694 = pneg %p281
        %p695 = pneg %p278
        %p696 = pneg %p302
        %p697 = pneg %p299
        %p698 = pneg %p323
        %p699 = pneg %p320
        %p700 = pneg %p344
        %p701 = pneg %p341
        %p702 = pneg %p370
        %p703 = pneg %p367
        %s704 = sand.u32 %s357, 1
        %s705 = scalar_lea.sflag [#allocation4], %s704
        %s706 = sand.u32 %s357, 1
        %s707 = scalar_lea.vmem [#allocation19], %s706
        %p708 = scmp.lt.s32.totalorder %s41, 1
        %s709 = scalar_select %p708, %s41, 1
        %s710 = smul.addr %s709, 2
        %s711 = smul.addr %s710, 4
        %s712 = scalar_lea.vmem %s2, %s711
        %v714 = vld [vmem:[%s577] sm:$0xf]
        %v715 = vld [vmem:[%s577 + $0x4] sm:$0xf]
        %v716 = vld [vmem:[%s595] sm:$0xf]
        %v717 = vld [vmem:[%s595 + $0x4] sm:$0xf]
        %v718 = vld [vmem:[#allocation13] sm:$0xf]
        %v719 = vld [vmem:[#allocation16] sm:$0xf]
        %v720 = vld [vmem:[#allocation16 + $0x4] sm:$0xf]
        %v721 = vld [vmem:[#allocation16 + $0x8] sm:$0xf]
        %v722 = vld [vmem:[#allocation16 + $0xc] sm:$0xf]
        %v723 = vld [vmem:[#allocation16 + $0x10] sm:$0xf]
        %v724 = vld [vmem:[#allocation16 + $0x14] sm:$0xf]
        %v725 = vld [vmem:[#allocation16 + $0x18] sm:$0xf]
        %v726 = vld [vmem:[#allocation16 + $0x1c] sm:$0xf]
        %v727 = vld [vmem:[#allocation16 + $0x20] sm:$0xf]
        %v728 = vld [vmem:[#allocation16 + $0x24] sm:$0xf]
        %v729 = vld [vmem:[#allocation16 + $0x28] sm:$0xf]
        %v730 = vld [vmem:[#allocation16 + $0x2c] sm:$0xf]
        %v731 = vld [vmem:[#allocation16 + $0x30] sm:$0xf]
        %v732 = vld [vmem:[#allocation16 + $0x34] sm:$0xf]
        %v733 = vld [vmem:[#allocation16 + $0x38] sm:$0xf]
        %v734 = vld [vmem:[#allocation16 + $0x3c] sm:$0xf]
        %v735 = vld [vmem:[#allocation14] sm:$0xf]
        %v736 = vld [vmem:[#allocation14 + $0x4] sm:$0xf]
        %v737 = vld [vmem:[#allocation14 + $0x8] sm:$0xf]
        %v738 = vld [vmem:[#allocation14 + $0xc] sm:$0xf]
        %v739 = vld [vmem:[#allocation14 + $0x10] sm:$0xf]
        %v740 = vld [vmem:[#allocation14 + $0x14] sm:$0xf]
        %v741 = vld [vmem:[#allocation14 + $0x18] sm:$0xf]
        %v742 = vld [vmem:[#allocation14 + $0x1c] sm:$0xf]
        %v743 = vld [vmem:[#allocation14 + $0x20] sm:$0xf]
        %v744 = vld [vmem:[#allocation14 + $0x24] sm:$0xf]
        %v745 = vld [vmem:[#allocation14 + $0x28] sm:$0xf]
        %v746 = vld [vmem:[#allocation14 + $0x2c] sm:$0xf]
        %v747 = vld [vmem:[#allocation14 + $0x30] sm:$0xf]
        %v748 = vld [vmem:[#allocation14 + $0x34] sm:$0xf]
        %v749 = vld [vmem:[#allocation14 + $0x38] sm:$0xf]
        %v750 = vld [vmem:[#allocation14 + $0x3c] sm:$0xf]
        %v753 = vunpack.c.l.b16 %v714
        %v754 = vunpack.c.l.b16 %v715
        %v755 = vpack.c.b16 %v754, %v753
        %v773 = vunpack.c.l.b16 %v735
        %v774 = vunpack.c.l.b16 %v736
        %v775 = vunpack.c.l.b16 %v737
        %v776 = vunpack.c.l.b16 %v738
        %v777 = vunpack.c.l.b16 %v739
        %v778 = vunpack.c.l.b16 %v740
        %v779 = vunpack.c.l.b16 %v741
        %v780 = vunpack.c.l.b16 %v742
        %v781 = vunpack.c.l.b16 %v743
        %v782 = vunpack.c.l.b16 %v744
        %v783 = vunpack.c.l.b16 %v745
        %v784 = vunpack.c.l.b16 %v746
        %v785 = vunpack.c.l.b16 %v747
        %v786 = vunpack.c.l.b16 %v748
        %v787 = vunpack.c.l.b16 %v749
        %v788 = vunpack.c.l.b16 %v750
        %v789 = vpack.c.b16 %v774, %v773
        %v790 = vpack.c.b16 %v776, %v775
        %v791 = vpack.c.b16 %v778, %v777
        %v792 = vpack.c.b16 %v780, %v779
        %v793 = vpack.c.b16 %v782, %v781
        %v794 = vpack.c.b16 %v784, %v783
        %v795 = vpack.c.b16 %v786, %v785
        %v796 = vpack.c.b16 %v788, %v787
        %805 = vmatprep.subr.bf16.mxu0 0
        %806 = vmatpush1.bf16.msra.mxu0 %v789
        %807 = vmatprep.subr.bf16.mxu0 0
        %808 = vmatpush1.bf16.msra.mxu0 %v790
        %809 = vmatprep.subr.bf16.mxu0 0
        %810 = vmatpush1.bf16.msra.mxu0 %v791
        %811 = vmatprep.subr.bf16.mxu0 0
        %812 = vmatpush1.bf16.msra.mxu0 %v792
        %813 = vmatprep.subr.bf16.mxu0 0
        %814 = vmatpush1.bf16.msra.mxu0 %v793
        %815 = vmatprep.subr.bf16.mxu0 0
        %816 = vmatpush1.bf16.msra.mxu0 %v794
        %817 = vmatprep.subr.bf16.mxu0 0
        %818 = vmatpush1.bf16.msra.mxu0 %v795
        %819 = vmatprep.subr.bf16.mxu0 0
        %820 = vmatpush1.bf16.msra.mxu0 %v796
        %821 = vmatprep.subr.bf16.mxu0 0
        %822 = vmatpush1.bf16.msra.mxu0 0
        %823 = vmatprep.subr.bf16.mxu0 0
        %824 = vmatpush1.bf16.msra.mxu0 0
        %825 = vmatprep.subr.bf16.mxu0 0
        %826 = vmatpush1.bf16.msra.mxu0 0
        %827 = vmatprep.subr.bf16.mxu0 0
        %828 = vmatpush1.bf16.msra.mxu0 0
        %829 = vmatprep.subr.bf16.mxu0 0
        %830 = vmatpush1.bf16.msra.mxu0 0
        %831 = vmatprep.subr.bf16.mxu0 0
        %832 = vmatpush1.bf16.msra.mxu0 0
        %833 = vmatprep.subr.bf16.mxu0 0
        %834 = vmatpush1.bf16.msra.mxu0 0
        %835 = vmatprep.subr.bf16.mxu0 0
        %836 = vmatpush1.bf16.msra.mxu0 0
        %837 = vmatprep.mubr.bf16.mxu0 0
        %838 = vmatmul.mubr.bf16.gmra.mrb[0].mxu0 %v755
        %v839 = vpop.f32.mrb[0].mxu0
        %v840 = vadd.f32 0.0, %v839
        %v841 = vpop.f32.mrb[0].mxu0
        %v842 = vpop.f32.mrb[0].mxu0
        %v843 = vadd.f32 0.0, %v842
        %v844 = vpop.f32.mrb[0].mxu0
        %845 = vdwg.mxu0
        %v846 = vmax.f32 %v840, 0.0
        %v847 = vmax.f32 %v843, 0.0
        %v848 = vld [vmem:[%s712] sm:$0xf]
        %v849 = vld [vmem:[%s712 + $0x4] sm:$0xf]
        %v852 = vunpack.c.l.b16 %v848
        %v853 = vunpack.c.l.b16 %v849
        %v854 = vpack.c.b16 %v853, %v852
        %vm855 = vcmask 64512
        %v857 = vsel %vm855, %v854, 0
        %vm859 = vcmask 1043456
        %v861 = vsel %vm859, %v718, 0
        %863 = vmatprep.subr.bf16.mxu0 0
        %864 = vmatpush1.bf16.msra.mxu0 %v861
        %865 = vmatprep.subr.bf16.mxu0 0
        %866 = vmatpush1.bf16.msra.mxu0 0
        %867 = vmatprep.subr.bf16.mxu0 0
        %868 = vmatpush1.bf16.msra.mxu0 0
        %869 = vmatprep.subr.bf16.mxu0 0
        %870 = vmatpush1.bf16.msra.mxu0 0
        %871 = vmatprep.subr.bf16.mxu0 0
        %872 = vmatpush1.bf16.msra.mxu0 0
        %873 = vmatprep.subr.bf16.mxu0 0
        %874 = vmatpush1.bf16.msra.mxu0 0
        %875 = vmatprep.subr.bf16.mxu0 0
        %876 = vmatpush1.bf16.msra.mxu0 0
        %877 = vmatprep.subr.bf16.mxu0 0
        %878 = vmatpush1.bf16.msra.mxu0 0
        %879 = vmatprep.subr.bf16.mxu0 0
        %880 = vmatpush1.bf16.msra.mxu0 0
        %881 = vmatprep.subr.bf16.mxu0 0
        %882 = vmatpush1.bf16.msra.mxu0 0
        %883 = vmatprep.subr.bf16.mxu0 0
        %884 = vmatpush1.bf16.msra.mxu0 0
        %885 = vmatprep.subr.bf16.mxu0 0
        %886 = vmatpush1.bf16.msra.mxu0 0
        %887 = vmatprep.subr.bf16.mxu0 0
        %888 = vmatpush1.bf16.msra.mxu0 0
        %889 = vmatprep.subr.bf16.mxu0 0
        %890 = vmatpush1.bf16.msra.mxu0 0
        %891 = vmatprep.subr.bf16.mxu0 0
        %892 = vmatpush1.bf16.msra.mxu0 0
        %893 = vmatprep.subr.bf16.mxu0 0
        %894 = vmatpush1.bf16.msra.mxu0 0
        %895 = vmatprep.mubr.bf16.mxu0 0
        %896 = vmatmul.mubr.bf16.gmra.mrb[0].mxu0 %v857
        %v897 = vpop.f32.mrb[0].mxu0
        %v898 = vadd.f32 0.0, %v897
        %v899 = vpop.f32.mrb[0].mxu0
        %v900 = vpop.f32.mrb[0].mxu0
        %v901 = vadd.f32 0.0, %v900
        %v902 = vpop.f32.mrb[0].mxu0
        %903 = vdwg.mxu0
        %v904 = vpack.c.bf16 %v847, %v846
        %v907 = vunpack.c.l.b16 %v716
        %v908 = vunpack.c.l.b16 %v717
        %v909 = vpack.c.b16 %v908, %v907
        %vm910 = vcmask 130048
        %v912 = vsel %vm910, %v909, 0
        %914 = vmatprep.subr.bf16.mxu0 0
        %915 = vmatpush1.bf16.msra.mxu0 %v904
        %916 = vmatprep.subr.bf16.mxu0 0
        %917 = vmatpush1.bf16.msra.mxu0 0
        %918 = vmatprep.subr.bf16.mxu0 0
        %919 = vmatpush1.bf16.msra.mxu0 0
        %920 = vmatprep.subr.bf16.mxu0 0
        %921 = vmatpush1.bf16.msra.mxu0 0
        %922 = vmatprep.subr.bf16.mxu0 0
        %923 = vmatpush1.bf16.msra.mxu0 0
        %924 = vmatprep.subr.bf16.mxu0 0
        %925 = vmatpush1.bf16.msra.mxu0 0
        %926 = vmatprep.subr.bf16.mxu0 0
        %927 = vmatpush1.bf16.msra.mxu0 0
        %928 = vmatprep.subr.bf16.mxu0 0
        %929 = vmatpush1.bf16.msra.mxu0 0
        %930 = vmatprep.subr.bf16.mxu0 0
        %931 = vmatpush1.bf16.msra.mxu0 0
        %932 = vmatprep.subr.bf16.mxu0 0
        %933 = vmatpush1.bf16.msra.mxu0 0
        %934 = vmatprep.subr.bf16.mxu0 0
        %935 = vmatpush1.bf16.msra.mxu0 0
        %936 = vmatprep.subr.bf16.mxu0 0
        %937 = vmatpush1.bf16.msra.mxu0 0
        %938 = vmatprep.subr.bf16.mxu0 0
        %939 = vmatpush1.bf16.msra.mxu0 0
        %940 = vmatprep.subr.bf16.mxu0 0
        %941 = vmatpush1.bf16.msra.mxu0 0
        %942 = vmatprep.subr.bf16.mxu0 0
        %943 = vmatpush1.bf16.msra.mxu0 0
        %944 = vmatprep.subr.bf16.mxu0 0
        %945 = vmatpush1.bf16.msra.mxu0 0
        %946 = vmatprep.mubr.bf16.mxu0 0
        %947 = vmatmul.mubr.bf16.gmra.mrb[0].mxu0 %v912
        %v948 = vpop.f32.mrb[0].mxu0
        %v949 = vadd.f32 0.0, %v948
        %v950 = vpop.f32.mrb[0].mxu0
        %v951 = vpop.f32.mrb[0].mxu0
        %v952 = vadd.f32 0.0, %v951
        %v953 = vpop.f32.mrb[0].mxu0
        %954 = vdwg.mxu0
        %v955 = vadd.f32 %v898, %v949
        %v956 = vadd.f32 %v901, %v952
        %v957 = vpack.c.bf16 %v956, %v955
        %v974 = vunpack.c.l.b16 %v719
        %v975 = vunpack.c.l.b16 %v720
        %v976 = vunpack.c.l.b16 %v721
        %v977 = vunpack.c.l.b16 %v722
        %v978 = vunpack.c.l.b16 %v723
        %v979 = vunpack.c.l.b16 %v724
        %v980 = vunpack.c.l.b16 %v725
        %v981 = vunpack.c.l.b16 %v726
        %v982 = vunpack.c.l.b16 %v727
        %v983 = vunpack.c.l.b16 %v728
        %v984 = vunpack.c.l.b16 %v729
        %v985 = vunpack.c.l.b16 %v730
        %v986 = vunpack.c.l.b16 %v731
        %v987 = vunpack.c.l.b16 %v732
        %v988 = vunpack.c.l.b16 %v733
        %v989 = vunpack.c.l.b16 %v734
        %v990 = vpack.c.b16 %v975, %v974
        %v991 = vpack.c.b16 %v977, %v976
        %v992 = vpack.c.b16 %v979, %v978
        %v993 = vpack.c.b16 %v981, %v980
        %v994 = vpack.c.b16 %v983, %v982
        %v995 = vpack.c.b16 %v985, %v984
        %v996 = vpack.c.b16 %v987, %v986
        %v997 = vpack.c.b16 %v989, %v988
        %1006 = vmatprep.subr.bf16.mxu0 0
        %1007 = vmatpush1.bf16.msra.mxu0 %v990
        %1008 = vmatprep.subr.bf16.mxu0 0
        %1009 = vmatpush1.bf16.msra.mxu0 %v991
        %1010 = vmatprep.subr.bf16.mxu0 0
        %1011 = vmatpush1.bf16.msra.mxu0 %v992
        %1012 = vmatprep.subr.bf16.mxu0 0
        %1013 = vmatpush1.bf16.msra.mxu0 %v993
        %1014 = vmatprep.subr.bf16.mxu0 0
        %1015 = vmatpush1.bf16.msra.mxu0 %v994
        %1016 = vmatprep.subr.bf16.mxu0 0
        %1017 = vmatpush1.bf16.msra.mxu0 %v995
        %1018 = vmatprep.subr.bf16.mxu0 0
        %1019 = vmatpush1.bf16.msra.mxu0 %v996
        %1020 = vmatprep.subr.bf16.mxu0 0
        %1021 = vmatpush1.bf16.msra.mxu0 %v997
        %1022 = vmatprep.subr.bf16.mxu0 0
        %1023 = vmatpush1.bf16.msra.mxu0 0
        %1024 = vmatprep.subr.bf16.mxu0 0
        %1025 = vmatpush1.bf16.msra.mxu0 0
        %1026 = vmatprep.subr.bf16.mxu0 0
        %1027 = vmatpush1.bf16.msra.mxu0 0
        %1028 = vmatprep.subr.bf16.mxu0 0
        %1029 = vmatpush1.bf16.msra.mxu0 0
        %1030 = vmatprep.subr.bf16.mxu0 0
        %1031 = vmatpush1.bf16.msra.mxu0 0
        %1032 = vmatprep.subr.bf16.mxu0 0
        %1033 = vmatpush1.bf16.msra.mxu0 0
        %1034 = vmatprep.subr.bf16.mxu0 0
        %1035 = vmatpush1.bf16.msra.mxu0 0
        %1036 = vmatprep.subr.bf16.mxu0 0
        %1037 = vmatpush1.bf16.msra.mxu0 0
        %1038 = vmatprep.mubr.bf16.mxu0 0
        %1039 = vmatmul.mubr.bf16.gmra.mrb[0].mxu0 %v957
        %v1040 = vpop.f32.mrb[0].mxu0
        %v1041 = vadd.f32 0.0, %v1040
        %v1042 = vpop.f32.mrb[0].mxu0
        %v1043 = vpop.f32.mrb[0].mxu0
        %v1044 = vadd.f32 0.0, %v1043
        %v1045 = vpop.f32.mrb[0].mxu0
        %1046 = vdwg.mxu0
        %v1047 = vadd.f32 %v840, %v1041
        %v1048 = vadd.f32 %v843, %v1044
        %v1049 = vmax.f32 %v1047, 0.0
        %v1050 = vmax.f32 %v1048, 0.0
        %v1051 = vpack.c.bf16 %v1050, %v1049
        %1052 = vmatprep.subr.bf16.mxu0 0
        %1053 = vmatpush1.bf16.msra.mxu0 %v1051
        %1054 = vmatprep.subr.bf16.mxu0 0
        %1055 = vmatpush1.bf16.msra.mxu0 0
        %1056 = vmatprep.subr.bf16.mxu0 0
        %1057 = vmatpush1.bf16.msra.mxu0 0
        %1058 = vmatprep.subr.bf16.mxu0 0
        %1059 = vmatpush1.bf16.msra.mxu0 0
        %1060 = vmatprep.subr.bf16.mxu0 0
        %1061 = vmatpush1.bf16.msra.mxu0 0
        %1062 = vmatprep.subr.bf16.mxu0 0
        %1063 = vmatpush1.bf16.msra.mxu0 0
        %1064 = vmatprep.subr.bf16.mxu0 0
        %1065 = vmatpush1.bf16.msra.mxu0 0
        %1066 = vmatprep.subr.bf16.mxu0 0
        %1067 = vmatpush1.bf16.msra.mxu0 0
        %1068 = vmatprep.subr.bf16.mxu0 0
        %1069 = vmatpush1.bf16.msra.mxu0 0
        %1070 = vmatprep.subr.bf16.mxu0 0
        %1071 = vmatpush1.bf16.msra.mxu0 0
        %1072 = vmatprep.subr.bf16.mxu0 0
        %1073 = vmatpush1.bf16.msra.mxu0 0
        %1074 = vmatprep.subr.bf16.mxu0 0
        %1075 = vmatpush1.bf16.msra.mxu0 0
        %1076 = vmatprep.subr.bf16.mxu0 0
        %1077 = vmatpush1.bf16.msra.mxu0 0
        %1078 = vmatprep.subr.bf16.mxu0 0
        %1079 = vmatpush1.bf16.msra.mxu0 0
        %1080 = vmatprep.subr.bf16.mxu0 0
        %1081 = vmatpush1.bf16.msra.mxu0 0
        %1082 = vmatprep.subr.bf16.mxu0 0
        %1083 = vmatpush1.bf16.msra.mxu0 0
        %1084 = vmatprep.mubr.bf16.mxu0 0
        %1085 = vmatmul.mubr.bf16.gmra.mrb[0].mxu0 %v912
        %v1086 = vpop.f32.mrb[0].mxu0
        %v1087 = vadd.f32 0.0, %v1086
        %v1088 = vpop.f32.mrb[0].mxu0
        %v1089 = vpop.f32.mrb[0].mxu0
        %v1090 = vadd.f32 0.0, %v1089
        %v1091 = vpop.f32.mrb[0].mxu0
        %1092 = vdwg.mxu0
        %v1093 = vadd.f32 %v898, %v1087
        %v1094 = vadd.f32 %v901, %v1090
        %v1095 = vpack.c.bf16 %v1094, %v1093
        %1096 = vmatprep.subr.bf16.mxu0 0
        %1097 = vmatpush1.bf16.msra.mxu0 %v990
        %1098 = vmatprep.subr.bf16.mxu0 0
        %1099 = vmatpush1.bf16.msra.mxu0 %v991
        %1100 = vmatprep.subr.bf16.mxu0 0
        %1101 = vmatpush1.bf16.msra.mxu0 %v992
        %1102 = vmatprep.subr.bf16.mxu0 0
        %1103 = vmatpush1.bf16.msra.mxu0 %v993
        %1104 = vmatprep.subr.bf16.mxu0 0
        %1105 = vmatpush1.bf16.msra.mxu0 %v994
        %1106 = vmatprep.subr.bf16.mxu0 0
        %1107 = vmatpush1.bf16.msra.mxu0 %v995
        %1108 = vmatprep.subr.bf16.mxu0 0
        %1109 = vmatpush1.bf16.msra.mxu0 %v996
        %1110 = vmatprep.subr.bf16.mxu0 0
        %1111 = vmatpush1.bf16.msra.mxu0 %v997
        %1112 = vmatprep.subr.bf16.mxu0 0
        %1113 = vmatpush1.bf16.msra.mxu0 0
        %1114 = vmatprep.subr.bf16.mxu0 0
        %1115 = vmatpush1.bf16.msra.mxu0 0
        %1116 = vmatprep.subr.bf16.mxu0 0
        %1117 = vmatpush1.bf16.msra.mxu0 0
        %1118 = vmatprep.subr.bf16.mxu0 0
        %1119 = vmatpush1.bf16.msra.mxu0 0
        %1120 = vmatprep.subr.bf16.mxu0 0
        %1121 = vmatpush1.bf16.msra.mxu0 0
        %1122 = vmatprep.subr.bf16.mxu0 0
        %1123 = vmatpush1.bf16.msra.mxu0 0
        %1124 = vmatprep.subr.bf16.mxu0 0
        %1125 = vmatpush1.bf16.msra.mxu0 0
        %1126 = vmatprep.subr.bf16.mxu0 0
        %1127 = vmatpush1.bf16.msra.mxu0 0
        %1128 = vmatprep.mubr.bf16.mxu0 0
        %1129 = vmatmul.mubr.bf16.gmra.mrb[0].mxu0 %v1095
        %v1130 = vpop.f32.mrb[0].mxu0
        %v1131 = vadd.f32 0.0, %v1130
        %v1132 = vpop.f32.mrb[0].mxu0
        %v1133 = vpop.f32.mrb[0].mxu0
        %v1134 = vadd.f32 0.0, %v1133
        %v1135 = vpop.f32.mrb[0].mxu0
        %1136 = vdwg.mxu0
        %v1137 = vadd.f32 %v840, %v1131
        %v1138 = vadd.f32 %v843, %v1134
        %v1139 = vmax.f32 %v1137, 0.0
        %v1140 = vmax.f32 %v1138, 0.0
        %v1141 = vld [vmem:[%s604] sm:$0xf]
        %v1142 = vld [vmem:[%s613] sm:$0xf]
        %v1143 = vpack.c.bf16 %v1140, %v1139
        %v1145 = vsel %vm910, %v1142, 0
        %1147 = vmatprep.subr.bf16.mxu0 0
        %1148 = vmatpush1.bf16.msra.mxu0 %v1143
        %1149 = vmatprep.subr.bf16.mxu0 0
        %1150 = vmatpush1.bf16.msra.mxu0 0
        %1151 = vmatprep.subr.bf16.mxu0 0
        %1152 = vmatpush1.bf16.msra.mxu0 0
        %1153 = vmatprep.subr.bf16.mxu0 0
        %1154 = vmatpush1.bf16.msra.mxu0 0
        %1155 = vmatprep.subr.bf16.mxu0 0
        %1156 = vmatpush1.bf16.msra.mxu0 0
        %1157 = vmatprep.subr.bf16.mxu0 0
        %1158 = vmatpush1.bf16.msra.mxu0 0
        %1159 = vmatprep.subr.bf16.mxu0 0
        %1160 = vmatpush1.bf16.msra.mxu0 0
        %1161 = vmatprep.subr.bf16.mxu0 0
        %1162 = vmatpush1.bf16.msra.mxu0 0
        %1163 = vmatprep.subr.bf16.mxu0 0
        %1164 = vmatpush1.bf16.msra.mxu0 0
        %1165 = vmatprep.subr.bf16.mxu0 0
        %1166 = vmatpush1.bf16.msra.mxu0 0
        %1167 = vmatprep.subr.bf16.mxu0 0
        %1168 = vmatpush1.bf16.msra.mxu0 0
        %1169 = vmatprep.subr.bf16.mxu0 0
        %1170 = vmatpush1.bf16.msra.mxu0 0
        %1171 = vmatprep.subr.bf16.mxu0 0
        %1172 = vmatpush1.bf16.msra.mxu0 0
        %1173 = vmatprep.subr.bf16.mxu0 0
        %1174 = vmatpush1.bf16.msra.mxu0 0
        %1175 = vmatprep.subr.bf16.mxu0 0
        %1176 = vmatpush1.bf16.msra.mxu0 0
        %1177 = vmatprep.subr.bf16.mxu0 0
        %1178 = vmatpush1.bf16.msra.mxu0 0
        %1179 = vmatprep.mubr.bf16.mxu0 0
        %1180 = vmatmul.mubr.bf16.gmra.mrb[0].mxu0 %v1145
        %v1181 = vpop.f32.mrb[0].mxu0
        %v1182 = vadd.f32 0.0, %v1181
        %v1183 = vpop.f32.mrb[0].mxu0
        %v1184 = vpop.f32.mrb[0].mxu0
        %v1185 = vpop.f32.mrb[0].mxu0
        %1186 = vdwg.mxu0
        %v1188 = vsel %vm855, %v1141, 0
        %1190 = vmatprep.subr.bf16.mxu0 0
        %1191 = vmatpush1.bf16.msra.mxu0 %v861
        %1192 = vmatprep.subr.bf16.mxu0 0
        %1193 = vmatpush1.bf16.msra.mxu0 0
        %1194 = vmatprep.subr.bf16.mxu0 0
        %1195 = vmatpush1.bf16.msra.mxu0 0
        %1196 = vmatprep.subr.bf16.mxu0 0
        %1197 = vmatpush1.bf16.msra.mxu0 0
        %1198 = vmatprep.subr.bf16.mxu0 0
        %1199 = vmatpush1.bf16.msra.mxu0 0
        %1200 = vmatprep.subr.bf16.mxu0 0
        %1201 = vmatpush1.bf16.msra.mxu0 0
        %1202 = vmatprep.subr.bf16.mxu0 0
        %1203 = vmatpush1.bf16.msra.mxu0 0
        %1204 = vmatprep.subr.bf16.mxu0 0
        %1205 = vmatpush1.bf16.msra.mxu0 0
        %1206 = vmatprep.subr.bf16.mxu0 0
        %1207 = vmatpush1.bf16.msra.mxu0 0
        %1208 = vmatprep.subr.bf16.mxu0 0
        %1209 = vmatpush1.bf16.msra.mxu0 0
        %1210 = vmatprep.subr.bf16.mxu0 0
        %1211 = vmatpush1.bf16.msra.mxu0 0
        %1212 = vmatprep.subr.bf16.mxu0 0
        %1213 = vmatpush1.bf16.msra.mxu0 0
        %1214 = vmatprep.subr.bf16.mxu0 0
        %1215 = vmatpush1.bf16.msra.mxu0 0
        %1216 = vmatprep.subr.bf16.mxu0 0
        %1217 = vmatpush1.bf16.msra.mxu0 0
        %1218 = vmatprep.subr.bf16.mxu0 0
        %1219 = vmatpush1.bf16.msra.mxu0 0
        %1220 = vmatprep.subr.bf16.mxu0 0
        %1221 = vmatpush1.bf16.msra.mxu0 0
        %1222 = vmatprep.mubr.bf16.mxu0 0
        %1223 = vmatmul.mubr.bf16.gmra.mrb[0].mxu0 %v1188
        %v1224 = vpop.f32.mrb[0].mxu0
        %v1225 = vadd.f32 %v1182, %v1224
        %v1226 = vpop.f32.mrb[0].mxu0
        %v1227 = vpop.f32.mrb[0].mxu0
        %v1228 = vpop.f32.mrb[0].mxu0
        %1229 = vdwg.mxu0
        %v1230 = vld [vmem:[%s586] sm:$0xf]
        %v1231 = vld [vmem:[#allocation17] sm:$0xf]
        %v1232 = vld [vmem:[#allocation17 + $0x4] sm:$0xf]
        %v1233 = vld [vmem:[#allocation17 + $0x8] sm:$0xf]
        %v1234 = vld [vmem:[#allocation17 + $0xc] sm:$0xf]
        %v1235 = vld [vmem:[#allocation17 + $0x10] sm:$0xf]
        %v1236 = vld [vmem:[#allocation17 + $0x14] sm:$0xf]
        %v1237 = vld [vmem:[#allocation17 + $0x18] sm:$0xf]
        %v1238 = vld [vmem:[#allocation17 + $0x1c] sm:$0xf]
        %v1239 = vld [vmem:[#allocation17 + $0x20] sm:$0xf]
        %v1240 = vld [vmem:[#allocation17 + $0x24] sm:$0xf]
        %v1241 = vld [vmem:[#allocation17 + $0x28] sm:$0xf]
        %v1242 = vld [vmem:[#allocation17 + $0x2c] sm:$0xf]
        %v1243 = vld [vmem:[#allocation17 + $0x30] sm:$0xf]
        %v1244 = vld [vmem:[#allocation17 + $0x34] sm:$0xf]
        %v1245 = vld [vmem:[#allocation17 + $0x38] sm:$0xf]
        %v1246 = vld [vmem:[#allocation17 + $0x3c] sm:$0xf]
        %v1247 = vpack.c.bf16 %v1225, %v1225
        %v1248 = vld [vmem:[%s11] sm:$0xf]
        %v1249 = vld [vmem:[%s11 + $0x4] sm:$0xf]
        %v1250 = vld [vmem:[%s11 + $0x8] sm:$0xf]
        %v1251 = vld [vmem:[%s11 + $0xc] sm:$0xf]
        %v1252 = vld [vmem:[%s11 + $0x10] sm:$0xf]
        %v1253 = vld [vmem:[%s11 + $0x14] sm:$0xf]
        %v1254 = vld [vmem:[%s11 + $0x18] sm:$0xf]
        %v1255 = vld [vmem:[%s11 + $0x1c] sm:$0xf]
        %v1256 = vld [vmem:[%s11 + $0x20] sm:$0xf]
        %v1257 = vld [vmem:[%s11 + $0x24] sm:$0xf]
        %v1258 = vld [vmem:[%s11 + $0x28] sm:$0xf]
        %v1259 = vld [vmem:[%s11 + $0x2c] sm:$0xf]
        %v1260 = vld [vmem:[%s11 + $0x30] sm:$0xf]
        %v1261 = vld [vmem:[%s11 + $0x34] sm:$0xf]
        %v1262 = vld [vmem:[%s11 + $0x38] sm:$0xf]
        %v1263 = vld [vmem:[%s11 + $0x3c] sm:$0xf]
        %v1280 = vunpack.c.l.b16 %v1248
        %v1281 = vunpack.c.l.b16 %v1249
        %v1282 = vunpack.c.l.b16 %v1250
        %v1283 = vunpack.c.l.b16 %v1251
        %v1284 = vunpack.c.l.b16 %v1252
        %v1285 = vunpack.c.l.b16 %v1253
        %v1286 = vunpack.c.l.b16 %v1254
        %v1287 = vunpack.c.l.b16 %v1255
        %v1288 = vunpack.c.l.b16 %v1256
        %v1289 = vunpack.c.l.b16 %v1257
        %v1290 = vunpack.c.l.b16 %v1258
        %v1291 = vunpack.c.l.b16 %v1259
        %v1292 = vunpack.c.l.b16 %v1260
        %v1293 = vunpack.c.l.b16 %v1261
        %v1294 = vunpack.c.l.b16 %v1262
        %v1295 = vunpack.c.l.b16 %v1263
        %v1296 = vpack.c.b16 %v1281, %v1280
        %v1297 = vpack.c.b16 %v1283, %v1282
        %v1298 = vpack.c.b16 %v1285, %v1284
        %v1299 = vpack.c.b16 %v1287, %v1286
        %v1300 = vpack.c.b16 %v1289, %v1288
        %v1301 = vpack.c.b16 %v1291, %v1290
        %v1302 = vpack.c.b16 %v1293, %v1292
        %v1303 = vpack.c.b16 %v1295, %v1294
        %1312 = vmatprep.subr.bf16.mxu0 0
        %1313 = vmatpush1.bf16.msra.mxu0 %v1296
        %1314 = vmatprep.subr.bf16.mxu0 0
        %1315 = vmatpush1.bf16.msra.mxu0 %v1297
        %1316 = vmatprep.subr.bf16.mxu0 0
        %1317 = vmatpush1.bf16.msra.mxu0 %v1298
        %1318 = vmatprep.subr.bf16.mxu0 0
        %1319 = vmatpush1.bf16.msra.mxu0 %v1299
        %1320 = vmatprep.subr.bf16.mxu0 0
        %1321 = vmatpush1.bf16.msra.mxu0 %v1300
        %1322 = vmatprep.subr.bf16.mxu0 0
        %1323 = vmatpush1.bf16.msra.mxu0 %v1301
        %1324 = vmatprep.subr.bf16.mxu0 0
        %1325 = vmatpush1.bf16.msra.mxu0 %v1302
        %1326 = vmatprep.subr.bf16.mxu0 0
        %1327 = vmatpush1.bf16.msra.mxu0 %v1303
        %1328 = vmatprep.subr.bf16.mxu0 0
        %1329 = vmatpush1.bf16.msra.mxu0 0
        %1330 = vmatprep.subr.bf16.mxu0 0
        %1331 = vmatpush1.bf16.msra.mxu0 0
        %1332 = vmatprep.subr.bf16.mxu0 0
        %1333 = vmatpush1.bf16.msra.mxu0 0
        %1334 = vmatprep.subr.bf16.mxu0 0
        %1335 = vmatpush1.bf16.msra.mxu0 0
        %1336 = vmatprep.subr.bf16.mxu0 0
        %1337 = vmatpush1.bf16.msra.mxu0 0
        %1338 = vmatprep.subr.bf16.mxu0 0
        %1339 = vmatpush1.bf16.msra.mxu0 0
        %1340 = vmatprep.subr.bf16.mxu0 0
        %1341 = vmatpush1.bf16.msra.mxu0 0
        %1342 = vmatprep.subr.bf16.mxu0 0
        %1343 = vmatpush1.bf16.msra.mxu0 0
        %1344 = vmatprep.mubr.bf16.mxu0 0
        %1345 = vmatmul.mubr.bf16.gmra.mrb[0].mxu0 %v1247
        %v1346 = vpop.f32.mrb[0].mxu0
        %v1347 = vadd.f32 0.0, %v1346
        %v1348 = vpop.f32.mrb[0].mxu0
        %v1349 = vpop.f32.mrb[0].mxu0
        %v1350 = vpop.f32.mrb[0].mxu0
        %1351 = vdwg.mxu0
        %v1368 = vunpack.c.l.b16 %v1231
        %v1369 = vunpack.c.l.b16 %v1232
        %v1370 = vunpack.c.l.b16 %v1233
        %v1371 = vunpack.c.l.b16 %v1234
        %v1372 = vunpack.c.l.b16 %v1235
        %v1373 = vunpack.c.l.b16 %v1236
        %v1374 = vunpack.c.l.b16 %v1237
        %v1375 = vunpack.c.l.b16 %v1238
        %v1376 = vunpack.c.l.b16 %v1239
        %v1377 = vunpack.c.l.b16 %v1240
        %v1378 = vunpack.c.l.b16 %v1241
        %v1379 = vunpack.c.l.b16 %v1242
        %v1380 = vunpack.c.l.b16 %v1243
        %v1381 = vunpack.c.l.b16 %v1244
        %v1382 = vunpack.c.l.b16 %v1245
        %v1383 = vunpack.c.l.b16 %v1246
        %v1384 = vpack.c.b16 %v1369, %v1368
        %v1385 = vpack.c.b16 %v1371, %v1370
        %v1386 = vpack.c.b16 %v1373, %v1372
        %v1387 = vpack.c.b16 %v1375, %v1374
        %v1388 = vpack.c.b16 %v1377, %v1376
        %v1389 = vpack.c.b16 %v1379, %v1378
        %v1390 = vpack.c.b16 %v1381, %v1380
        %v1391 = vpack.c.b16 %v1383, %v1382
        %1400 = vmatprep.subr.bf16.mxu0 0
        %1401 = vmatpush1.bf16.msra.mxu0 %v1384
        %1402 = vmatprep.subr.bf16.mxu0 0
        %1403 = vmatpush1.bf16.msra.mxu0 %v1385
        %1404 = vmatprep.subr.bf16.mxu0 0
        %1405 = vmatpush1.bf16.msra.mxu0 %v1386
        %1406 = vmatprep.subr.bf16.mxu0 0
        %1407 = vmatpush1.bf16.msra.mxu0 %v1387
        %1408 = vmatprep.subr.bf16.mxu0 0
        %1409 = vmatpush1.bf16.msra.mxu0 %v1388
        %1410 = vmatprep.subr.bf16.mxu0 0
        %1411 = vmatpush1.bf16.msra.mxu0 %v1389
        %1412 = vmatprep.subr.bf16.mxu0 0
        %1413 = vmatpush1.bf16.msra.mxu0 %v1390
        %1414 = vmatprep.subr.bf16.mxu0 0
        %1415 = vmatpush1.bf16.msra.mxu0 %v1391
        %1416 = vmatprep.subr.bf16.mxu0 0
        %1417 = vmatpush1.bf16.msra.mxu0 0
        %1418 = vmatprep.subr.bf16.mxu0 0
        %1419 = vmatpush1.bf16.msra.mxu0 0
        %1420 = vmatprep.subr.bf16.mxu0 0
        %1421 = vmatpush1.bf16.msra.mxu0 0
        %1422 = vmatprep.subr.bf16.mxu0 0
        %1423 = vmatpush1.bf16.msra.mxu0 0
        %1424 = vmatprep.subr.bf16.mxu0 0
        %1425 = vmatpush1.bf16.msra.mxu0 0
        %1426 = vmatprep.subr.bf16.mxu0 0
        %1427 = vmatpush1.bf16.msra.mxu0 0
        %1428 = vmatprep.subr.bf16.mxu0 0
        %1429 = vmatpush1.bf16.msra.mxu0 0
        %1430 = vmatprep.subr.bf16.mxu0 0
        %1431 = vmatpush1.bf16.msra.mxu0 0
        %1432 = vmatprep.mubr.bf16.mxu0 0
        %1433 = vmatmul.mubr.bf16.gmra.mrb[0].mxu0 %v1230
        %v1434 = vpop.f32.mrb[0].mxu0
        %v1435 = vadd.f32 %v1347, %v1434
        %v1436 = vpop.f32.mrb[0].mxu0
        %v1437 = vpop.f32.mrb[0].mxu0
        %v1438 = vpop.f32.mrb[0].mxu0
        %1439 = vdwg.mxu0
        %v1440 = vld [vmem:[%s12] sm:$0x1]
        %v1442 = vlaneseq
        %v1443 = vshrl.u32 %v1442, 7
        %v1444 = vsub.s32 0, %v1443
        %v1445 = vrot.slane %v1440, %v1444
        %v1447 = vadd.f32 %v1435, %v1445
        %v1448 = vmax.f32 %v1447, 0.0
        %v1449 = vld [vmem:[%s621] sm:$0x1]
        %v1451 = vsel %vm855, %v1449, 0
        %1453 = vmatprep.subr.mxu0 0.0
        %v1454 = vand.u32 %v1448, 4294901760
        %1455 = vmatpush1.msra.mxu0 %v1454
        %1456 = vmatprep.subr.mxu0 0.0
        %1457 = vmatpush1.msra.mxu0 0.0
        %1458 = vmatprep.subr.mxu0 0.0
        %1459 = vmatpush1.msra.mxu0 0.0
        %1460 = vmatprep.subr.mxu0 0.0
        %1461 = vmatpush1.msra.mxu0 0.0
        %1462 = vmatprep.subr.mxu0 0.0
        %1463 = vmatpush1.msra.mxu0 0.0
        %1464 = vmatprep.subr.mxu0 0.0
        %1465 = vmatpush1.msra.mxu0 0.0
        %1466 = vmatprep.subr.mxu0 0.0
        %1467 = vmatpush1.msra.mxu0 0.0
        %1468 = vmatprep.subr.mxu0 0.0
        %1469 = vmatpush1.msra.mxu0 0.0
        %1470 = vmatprep.subr.mxu0 0.0
        %1471 = vmatpush1.msra.mxu0 0.0
        %1472 = vmatprep.subr.mxu0 0.0
        %1473 = vmatpush1.msra.mxu0 0.0
        %1474 = vmatprep.subr.mxu0 0.0
        %1475 = vmatpush1.msra.mxu0 0.0
        %1476 = vmatprep.subr.mxu0 0.0
        %1477 = vmatpush1.msra.mxu0 0.0
        %1478 = vmatprep.subr.mxu0 0.0
        %1479 = vmatpush1.msra.mxu0 0.0
        %1480 = vmatprep.subr.mxu0 0.0
        %1481 = vmatpush1.msra.mxu0 0.0
        %1482 = vmatprep.subr.mxu0 0.0
        %1483 = vmatpush1.msra.mxu0 0.0
        %1484 = vmatprep.subr.mxu0 0.0
        %1485 = vmatpush1.msra.mxu0 0.0
        %1486 = vmatprep.subr.mxu0 0.0
        %1487 = vmatpush1.msra.mxu0 0.0
        %1488 = vmatprep.subr.mxu0 0.0
        %1489 = vmatpush1.msra.mxu0 0.0
        %1490 = vmatprep.subr.mxu0 0.0
        %1491 = vmatpush1.msra.mxu0 0.0
        %1492 = vmatprep.subr.mxu0 0.0
        %1493 = vmatpush1.msra.mxu0 0.0
        %1494 = vmatprep.subr.mxu0 0.0
        %1495 = vmatpush1.msra.mxu0 0.0
        %1496 = vmatprep.subr.mxu0 0.0
        %1497 = vmatpush1.msra.mxu0 0.0
        %1498 = vmatprep.subr.mxu0 0.0
        %1499 = vmatpush1.msra.mxu0 0.0
        %1500 = vmatprep.subr.mxu0 0.0
        %1501 = vmatpush1.msra.mxu0 0.0
        %1502 = vmatprep.subr.mxu0 0.0
        %1503 = vmatpush1.msra.mxu0 0.0
        %1504 = vmatprep.subr.mxu0 0.0
        %1505 = vmatpush1.msra.mxu0 0.0
        %1506 = vmatprep.subr.mxu0 0.0
        %1507 = vmatpush1.msra.mxu0 0.0
        %1508 = vmatprep.subr.mxu0 0.0
        %1509 = vmatpush1.msra.mxu0 0.0
        %1510 = vmatprep.subr.mxu0 0.0
        %1511 = vmatpush1.msra.mxu0 0.0
        %1512 = vmatprep.subr.mxu0 0.0
        %1513 = vmatpush1.msra.mxu0 0.0
        %1514 = vmatprep.subr.mxu0 0.0
        %1515 = vmatpush1.msra.mxu0 0.0
        %1516 = vmatprep.subr.mxu0 0.0
        %1517 = vmatpush1.msra.mxu0 0.0
        %1518 = vmatprep.mubr.f32.mxu0 0.0
        %v1519 = vand.u32 %v1451, 4294901760
        %v1520 = vsub.f32 %v1451, %v1519
        %v1521 = vand.u32 %v1520, 4294901760
        %v1522 = vsub.f32 %v1520, %v1521
        %v1523 = vand.u32 %v1522, 4294901760
        %1524 = vmatmul.mubr.f32.gmra.mrb[0].mxu0 %v1523
        %v1525 = vpop.f32.mrb[0].mxu0
        %v1526 = vadd.f32 0.0, %v1525
        %v1527 = vpop.f32.mrb[0].mxu0
        %1528 = vdwg.mxu0
        %1529 = vmatprep.subr.mxu0 0.0
        %v1530 = vand.u32 %v1448, 4294901760
        %v1531 = vsub.f32 %v1448, %v1530
        %v1532 = vand.u32 %v1531, 4294901760
        %v1533 = vsub.f32 %v1531, %v1532
        %v1534 = vand.u32 %v1533, 4294901760
        %1535 = vmatpush1.msra.mxu0 %v1534
        %1536 = vmatprep.subr.mxu0 0.0
        %1537 = vmatpush1.msra.mxu0 0.0
        %1538 = vmatprep.subr.mxu0 0.0
        %1539 = vmatpush1.msra.mxu0 0.0
        %1540 = vmatprep.subr.mxu0 0.0
        %1541 = vmatpush1.msra.mxu0 0.0
        %1542 = vmatprep.subr.mxu0 0.0
        %1543 = vmatpush1.msra.mxu0 0.0
        %1544 = vmatprep.subr.mxu0 0.0
        %1545 = vmatpush1.msra.mxu0 0.0
        %1546 = vmatprep.subr.mxu0 0.0
        %1547 = vmatpush1.msra.mxu0 0.0
        %1548 = vmatprep.subr.mxu0 0.0
        %1549 = vmatpush1.msra.mxu0 0.0
        %1550 = vmatprep.subr.mxu0 0.0
        %1551 = vmatpush1.msra.mxu0 0.0
        %1552 = vmatprep.subr.mxu0 0.0
        %1553 = vmatpush1.msra.mxu0 0.0
        %1554 = vmatprep.subr.mxu0 0.0
        %1555 = vmatpush1.msra.mxu0 0.0
        %1556 = vmatprep.subr.mxu0 0.0
        %1557 = vmatpush1.msra.mxu0 0.0
        %1558 = vmatprep.subr.mxu0 0.0
        %1559 = vmatpush1.msra.mxu0 0.0
        %1560 = vmatprep.subr.mxu0 0.0
        %1561 = vmatpush1.msra.mxu0 0.0
        %1562 = vmatprep.subr.mxu0 0.0
        %1563 = vmatpush1.msra.mxu0 0.0
        %1564 = vmatprep.subr.mxu0 0.0
        %1565 = vmatpush1.msra.mxu0 0.0
        %1566 = vmatprep.subr.mxu0 0.0
        %1567 = vmatpush1.msra.mxu0 0.0
        %1568 = vmatprep.subr.mxu0 0.0
        %1569 = vmatpush1.msra.mxu0 0.0
        %1570 = vmatprep.subr.mxu0 0.0
        %1571 = vmatpush1.msra.mxu0 0.0
        %1572 = vmatprep.subr.mxu0 0.0
        %1573 = vmatpush1.msra.mxu0 0.0
        %1574 = vmatprep.subr.mxu0 0.0
        %1575 = vmatpush1.msra.mxu0 0.0
        %1576 = vmatprep.subr.mxu0 0.0
        %1577 = vmatpush1.msra.mxu0 0.0
        %1578 = vmatprep.subr.mxu0 0.0
        %1579 = vmatpush1.msra.mxu0 0.0
        %1580 = vmatprep.subr.mxu0 0.0
        %1581 = vmatpush1.msra.mxu0 0.0
        %1582 = vmatprep.subr.mxu0 0.0
        %1583 = vmatpush1.msra.mxu0 0.0
        %1584 = vmatprep.subr.mxu0 0.0
        %1585 = vmatpush1.msra.mxu0 0.0
        %1586 = vmatprep.subr.mxu0 0.0
        %1587 = vmatpush1.msra.mxu0 0.0
        %1588 = vmatprep.subr.mxu0 0.0
        %1589 = vmatpush1.msra.mxu0 0.0
        %1590 = vmatprep.subr.mxu0 0.0
        %1591 = vmatpush1.msra.mxu0 0.0
        %1592 = vmatprep.subr.mxu0 0.0
        %1593 = vmatpush1.msra.mxu0 0.0
        %1594 = vmatprep.subr.mxu0 0.0
        %1595 = vmatpush1.msra.mxu0 0.0
        %1596 = vmatprep.subr.mxu0 0.0
        %1597 = vmatpush1.msra.mxu0 0.0
        %1598 = vmatprep.mubr.f32.mxu0 0.0
        %v1599 = vand.u32 %v1451, 4294901760
        %1600 = vmatmul.mubr.f32.gmra.mrb[0].mxu0 %v1599
        %v1601 = vpop.f32.mrb[0].mxu0
        %v1602 = vadd.f32 %v1526, %v1601
        %v1603 = vpop.f32.mrb[0].mxu0
        %1604 = vdwg.mxu0
        %1605 = vmatprep.subr.mxu0 0.0
        %v1606 = vand.u32 %v1448, 4294901760
        %v1607 = vsub.f32 %v1448, %v1606
        %1608 = vmatpush1.msra.mxu0 %v1607
        %1609 = vmatprep.subr.mxu0 0.0
        %1610 = vmatpush1.msra.mxu0 0.0
        %1611 = vmatprep.subr.mxu0 0.0
        %1612 = vmatpush1.msra.mxu0 0.0
        %1613 = vmatprep.subr.mxu0 0.0
        %1614 = vmatpush1.msra.mxu0 0.0
        %1615 = vmatprep.subr.mxu0 0.0
        %1616 = vmatpush1.msra.mxu0 0.0
        %1617 = vmatprep.subr.mxu0 0.0
        %1618 = vmatpush1.msra.mxu0 0.0
        %1619 = vmatprep.subr.mxu0 0.0
        %1620 = vmatpush1.msra.mxu0 0.0
        %1621 = vmatprep.subr.mxu0 0.0
        %1622 = vmatpush1.msra.mxu0 0.0
        %1623 = vmatprep.subr.mxu0 0.0
        %1624 = vmatpush1.msra.mxu0 0.0
        %1625 = vmatprep.subr.mxu0 0.0
        %1626 = vmatpush1.msra.mxu0 0.0
        %1627 = vmatprep.subr.mxu0 0.0
        %1628 = vmatpush1.msra.mxu0 0.0
        %1629 = vmatprep.subr.mxu0 0.0
        %1630 = vmatpush1.msra.mxu0 0.0
        %1631 = vmatprep.subr.mxu0 0.0
        %1632 = vmatpush1.msra.mxu0 0.0
        %1633 = vmatprep.subr.mxu0 0.0
        %1634 = vmatpush1.msra.mxu0 0.0
        %1635 = vmatprep.subr.mxu0 0.0
        %1636 = vmatpush1.msra.mxu0 0.0
        %1637 = vmatprep.subr.mxu0 0.0
        %1638 = vmatpush1.msra.mxu0 0.0
        %1639 = vmatprep.subr.mxu0 0.0
        %1640 = vmatpush1.msra.mxu0 0.0
        %1641 = vmatprep.subr.mxu0 0.0
        %1642 = vmatpush1.msra.mxu0 0.0
        %1643 = vmatprep.subr.mxu0 0.0
        %1644 = vmatpush1.msra.mxu0 0.0
        %1645 = vmatprep.subr.mxu0 0.0
        %1646 = vmatpush1.msra.mxu0 0.0
        %1647 = vmatprep.subr.mxu0 0.0
        %1648 = vmatpush1.msra.mxu0 0.0
        %1649 = vmatprep.subr.mxu0 0.0
        %1650 = vmatpush1.msra.mxu0 0.0
        %1651 = vmatprep.subr.mxu0 0.0
        %1652 = vmatpush1.msra.mxu0 0.0
        %1653 = vmatprep.subr.mxu0 0.0
        %1654 = vmatpush1.msra.mxu0 0.0
        %1655 = vmatprep.subr.mxu0 0.0
        %1656 = vmatpush1.msra.mxu0 0.0
        %1657 = vmatprep.subr.mxu0 0.0
        %1658 = vmatpush1.msra.mxu0 0.0
        %1659 = vmatprep.subr.mxu0 0.0
        %1660 = vmatpush1.msra.mxu0 0.0
        %1661 = vmatprep.subr.mxu0 0.0
        %1662 = vmatpush1.msra.mxu0 0.0
        %1663 = vmatprep.subr.mxu0 0.0
        %1664 = vmatpush1.msra.mxu0 0.0
        %1665 = vmatprep.subr.mxu0 0.0
        %1666 = vmatpush1.msra.mxu0 0.0
        %1667 = vmatprep.subr.mxu0 0.0
        %1668 = vmatpush1.msra.mxu0 0.0
        %1669 = vmatprep.subr.mxu0 0.0
        %1670 = vmatpush1.msra.mxu0 0.0
        %1671 = vmatprep.mubr.f32.mxu0 0.0
        %v1672 = vand.u32 %v1451, 4294901760
        %v1673 = vsub.f32 %v1451, %v1672
        %1674 = vmatmul.mubr.f32.gmra.mrb[0].mxu0 %v1673
        %v1675 = vpop.f32.mrb[0].mxu0
        %v1676 = vadd.f32 %v1602, %v1675
        %v1677 = vpop.f32.mrb[0].mxu0
        %1678 = vdwg.mxu0
        %1679 = vmatprep.subr.mxu0 0.0
        %v1680 = vand.u32 %v1448, 4294901760
        %1681 = vmatpush1.msra.mxu0 %v1680
        %1682 = vmatprep.subr.mxu0 0.0
        %1683 = vmatpush1.msra.mxu0 0.0
        %1684 = vmatprep.subr.mxu0 0.0
        %1685 = vmatpush1.msra.mxu0 0.0
        %1686 = vmatprep.subr.mxu0 0.0
        %1687 = vmatpush1.msra.mxu0 0.0
        %1688 = vmatprep.subr.mxu0 0.0
        %1689 = vmatpush1.msra.mxu0 0.0
        %1690 = vmatprep.subr.mxu0 0.0
        %1691 = vmatpush1.msra.mxu0 0.0
        %1692 = vmatprep.subr.mxu0 0.0
        %1693 = vmatpush1.msra.mxu0 0.0
        %1694 = vmatprep.subr.mxu0 0.0
        %1695 = vmatpush1.msra.mxu0 0.0
        %1696 = vmatprep.subr.mxu0 0.0
        %1697 = vmatpush1.msra.mxu0 0.0
        %1698 = vmatprep.subr.mxu0 0.0
        %1699 = vmatpush1.msra.mxu0 0.0
        %1700 = vmatprep.subr.mxu0 0.0
        %1701 = vmatpush1.msra.mxu0 0.0
        %1702 = vmatprep.subr.mxu0 0.0
        %1703 = vmatpush1.msra.mxu0 0.0
        %1704 = vmatprep.subr.mxu0 0.0
        %1705 = vmatpush1.msra.mxu0 0.0
        %1706 = vmatprep.subr.mxu0 0.0
        %1707 = vmatpush1.msra.mxu0 0.0
        %1708 = vmatprep.subr.mxu0 0.0
        %1709 = vmatpush1.msra.mxu0 0.0
        %1710 = vmatprep.subr.mxu0 0.0
        %1711 = vmatpush1.msra.mxu0 0.0
        %1712 = vmatprep.subr.mxu0 0.0
        %1713 = vmatpush1.msra.mxu0 0.0
        %1714 = vmatprep.subr.mxu0 0.0
        %1715 = vmatpush1.msra.mxu0 0.0
        %1716 = vmatprep.subr.mxu0 0.0
        %1717 = vmatpush1.msra.mxu0 0.0
        %1718 = vmatprep.subr.mxu0 0.0
        %1719 = vmatpush1.msra.mxu0 0.0
        %1720 = vmatprep.subr.mxu0 0.0
        %1721 = vmatpush1.msra.mxu0 0.0
        %1722 = vmatprep.subr.mxu0 0.0
        %1723 = vmatpush1.msra.mxu0 0.0
        %1724 = vmatprep.subr.mxu0 0.0
        %1725 = vmatpush1.msra.mxu0 0.0
        %1726 = vmatprep.subr.mxu0 0.0
        %1727 = vmatpush1.msra.mxu0 0.0
        %1728 = vmatprep.subr.mxu0 0.0
        %1729 = vmatpush1.msra.mxu0 0.0
        %1730 = vmatprep.subr.mxu0 0.0
        %1731 = vmatpush1.msra.mxu0 0.0
        %1732 = vmatprep.subr.mxu0 0.0
        %1733 = vmatpush1.msra.mxu0 0.0
        %1734 = vmatprep.subr.mxu0 0.0
        %1735 = vmatpush1.msra.mxu0 0.0
        %1736 = vmatprep.subr.mxu0 0.0
        %1737 = vmatpush1.msra.mxu0 0.0
        %1738 = vmatprep.subr.mxu0 0.0
        %1739 = vmatpush1.msra.mxu0 0.0
        %1740 = vmatprep.subr.mxu0 0.0
        %1741 = vmatpush1.msra.mxu0 0.0
        %1742 = vmatprep.subr.mxu0 0.0
        %1743 = vmatpush1.msra.mxu0 0.0
        %1744 = vmatprep.mubr.f32.mxu0 0.0
        %v1745 = vand.u32 %v1451, 4294901760
        %v1746 = vsub.f32 %v1451, %v1745
        %v1747 = vand.u32 %v1746, 4294901760
        %1748 = vmatmul.mubr.f32.gmra.mrb[0].mxu0 %v1747
        %v1749 = vpop.f32.mrb[0].mxu0
        %v1750 = vadd.f32 %v1676, %v1749
        %v1751 = vpop.f32.mrb[0].mxu0
        %1752 = vdwg.mxu0
        %1753 = vmatprep.subr.mxu0 0.0
        %v1754 = vand.u32 %v1448, 4294901760
        %v1755 = vsub.f32 %v1448, %v1754
        %v1756 = vand.u32 %v1755, 4294901760
        %1757 = vmatpush1.msra.mxu0 %v1756
        %1758 = vmatprep.subr.mxu0 0.0
        %1759 = vmatpush1.msra.mxu0 0.0
        %1760 = vmatprep.subr.mxu0 0.0
        %1761 = vmatpush1.msra.mxu0 0.0
        %1762 = vmatprep.subr.mxu0 0.0
        %1763 = vmatpush1.msra.mxu0 0.0
        %1764 = vmatprep.subr.mxu0 0.0
        %1765 = vmatpush1.msra.mxu0 0.0
        %1766 = vmatprep.subr.mxu0 0.0
        %1767 = vmatpush1.msra.mxu0 0.0
        %1768 = vmatprep.subr.mxu0 0.0
        %1769 = vmatpush1.msra.mxu0 0.0
        %1770 = vmatprep.subr.mxu0 0.0
        %1771 = vmatpush1.msra.mxu0 0.0
        %1772 = vmatprep.subr.mxu0 0.0
        %1773 = vmatpush1.msra.mxu0 0.0
        %1774 = vmatprep.subr.mxu0 0.0
        %1775 = vmatpush1.msra.mxu0 0.0
        %1776 = vmatprep.subr.mxu0 0.0
        %1777 = vmatpush1.msra.mxu0 0.0
        %1778 = vmatprep.subr.mxu0 0.0
        %1779 = vmatpush1.msra.mxu0 0.0
        %1780 = vmatprep.subr.mxu0 0.0
        %1781 = vmatpush1.msra.mxu0 0.0
        %1782 = vmatprep.subr.mxu0 0.0
        %1783 = vmatpush1.msra.mxu0 0.0
        %1784 = vmatprep.subr.mxu0 0.0
        %1785 = vmatpush1.msra.mxu0 0.0
        %1786 = vmatprep.subr.mxu0 0.0
        %1787 = vmatpush1.msra.mxu0 0.0
        %1788 = vmatprep.subr.mxu0 0.0
        %1789 = vmatpush1.msra.mxu0 0.0
        %1790 = vmatprep.subr.mxu0 0.0
        %1791 = vmatpush1.msra.mxu0 0.0
        %1792 = vmatprep.subr.mxu0 0.0
        %1793 = vmatpush1.msra.mxu0 0.0
        %1794 = vmatprep.subr.mxu0 0.0
        %1795 = vmatpush1.msra.mxu0 0.0
        %1796 = vmatprep.subr.mxu0 0.0
        %1797 = vmatpush1.msra.mxu0 0.0
        %1798 = vmatprep.subr.mxu0 0.0
        %1799 = vmatpush1.msra.mxu0 0.0
        %1800 = vmatprep.subr.mxu0 0.0
        %1801 = vmatpush1.msra.mxu0 0.0
        %1802 = vmatprep.subr.mxu0 0.0
        %1803 = vmatpush1.msra.mxu0 0.0
        %1804 = vmatprep.subr.mxu0 0.0
        %1805 = vmatpush1.msra.mxu0 0.0
        %1806 = vmatprep.subr.mxu0 0.0
        %1807 = vmatpush1.msra.mxu0 0.0
        %1808 = vmatprep.subr.mxu0 0.0
        %1809 = vmatpush1.msra.mxu0 0.0
        %1810 = vmatprep.subr.mxu0 0.0
        %1811 = vmatpush1.msra.mxu0 0.0
        %1812 = vmatprep.subr.mxu0 0.0
        %1813 = vmatpush1.msra.mxu0 0.0
        %1814 = vmatprep.subr.mxu0 0.0
        %1815 = vmatpush1.msra.mxu0 0.0
        %1816 = vmatprep.subr.mxu0 0.0
        %1817 = vmatpush1.msra.mxu0 0.0
        %1818 = vmatprep.subr.mxu0 0.0
        %1819 = vmatpush1.msra.mxu0 0.0
        %1820 = vmatprep.mubr.f32.mxu0 0.0
        %v1821 = vand.u32 %v1451, 4294901760
        %1822 = vmatmul.mubr.f32.gmra.mrb[0].mxu0 %v1821
        %v1823 = vpop.f32.mrb[0].mxu0
        %v1824 = vadd.f32 %v1750, %v1823
        %v1825 = vpop.f32.mrb[0].mxu0
        %1826 = vdwg.mxu0
        %1827 = vmatprep.subr.mxu0 0.0
        %v1828 = vand.u32 %v1448, 4294901760
        %1829 = vmatpush1.msra.mxu0 %v1828
        %1830 = vmatprep.subr.mxu0 0.0
        %1831 = vmatpush1.msra.mxu0 0.0
        %1832 = vmatprep.subr.mxu0 0.0
        %1833 = vmatpush1.msra.mxu0 0.0
        %1834 = vmatprep.subr.mxu0 0.0
        %1835 = vmatpush1.msra.mxu0 0.0
        %1836 = vmatprep.subr.mxu0 0.0
        %1837 = vmatpush1.msra.mxu0 0.0
        %1838 = vmatprep.subr.mxu0 0.0
        %1839 = vmatpush1.msra.mxu0 0.0
        %1840 = vmatprep.subr.mxu0 0.0
        %1841 = vmatpush1.msra.mxu0 0.0
        %1842 = vmatprep.subr.mxu0 0.0
        %1843 = vmatpush1.msra.mxu0 0.0
        %1844 = vmatprep.subr.mxu0 0.0
        %1845 = vmatpush1.msra.mxu0 0.0
        %1846 = vmatprep.subr.mxu0 0.0
        %1847 = vmatpush1.msra.mxu0 0.0
        %1848 = vmatprep.subr.mxu0 0.0
        %1849 = vmatpush1.msra.mxu0 0.0
        %1850 = vmatprep.subr.mxu0 0.0
        %1851 = vmatpush1.msra.mxu0 0.0
        %1852 = vmatprep.subr.mxu0 0.0
        %1853 = vmatpush1.msra.mxu0 0.0
        %1854 = vmatprep.subr.mxu0 0.0
        %1855 = vmatpush1.msra.mxu0 0.0
        %1856 = vmatprep.subr.mxu0 0.0
        %1857 = vmatpush1.msra.mxu0 0.0
        %1858 = vmatprep.subr.mxu0 0.0
        %1859 = vmatpush1.msra.mxu0 0.0
        %1860 = vmatprep.subr.mxu0 0.0
        %1861 = vmatpush1.msra.mxu0 0.0
        %1862 = vmatprep.subr.mxu0 0.0
        %1863 = vmatpush1.msra.mxu0 0.0
        %1864 = vmatprep.subr.mxu0 0.0
        %1865 = vmatpush1.msra.mxu0 0.0
        %1866 = vmatprep.subr.mxu0 0.0
        %1867 = vmatpush1.msra.mxu0 0.0
        %1868 = vmatprep.subr.mxu0 0.0
        %1869 = vmatpush1.msra.mxu0 0.0
        %1870 = vmatprep.subr.mxu0 0.0
        %1871 = vmatpush1.msra.mxu0 0.0
        %1872 = vmatprep.subr.mxu0 0.0
        %1873 = vmatpush1.msra.mxu0 0.0
        %1874 = vmatprep.subr.mxu0 0.0
        %1875 = vmatpush1.msra.mxu0 0.0
        %1876 = vmatprep.subr.mxu0 0.0
        %1877 = vmatpush1.msra.mxu0 0.0
        %1878 = vmatprep.subr.mxu0 0.0
        %1879 = vmatpush1.msra.mxu0 0.0
        %1880 = vmatprep.subr.mxu0 0.0
        %1881 = vmatpush1.msra.mxu0 0.0
        %1882 = vmatprep.subr.mxu0 0.0
        %1883 = vmatpush1.msra.mxu0 0.0
        %1884 = vmatprep.subr.mxu0 0.0
        %1885 = vmatpush1.msra.mxu0 0.0
        %1886 = vmatprep.subr.mxu0 0.0
        %1887 = vmatpush1.msra.mxu0 0.0
        %1888 = vmatprep.subr.mxu0 0.0
        %1889 = vmatpush1.msra.mxu0 0.0
        %1890 = vmatprep.subr.mxu0 0.0
        %1891 = vmatpush1.msra.mxu0 0.0
        %1892 = vmatprep.mubr.f32.mxu0 0.0
        %v1893 = vand.u32 %v1451, 4294901760
        %1894 = vmatmul.mubr.f32.gmra.mrb[0].mxu0 %v1893
        %v1895 = vpop.f32.mrb[0].mxu0
        %v1896 = vadd.f32 %v1824, %v1895
        %v1897 = vpop.f32.mrb[0].mxu0
        %1898 = vdwg.mxu0
        %1899 = vst [vmem:[%s707] sm:$0x1] %v1896
        %s1900 = sand.u32 %s357, 1
        %s1901 = scalar_lea.sflag [#allocation4], %s1900
        %s1902 = sand.u32 %s357, 1
        %s1903 = scalar_lea.vmem [#allocation19], %s1902
        // Predicated region
        $region113: #{tpu_custom_call.1} parent=71 // pred_check
          %p1904 = pneg %p367
        $region114: #{tpu_custom_call.1} parent=71 // pred_check_branch
          %1906 = sbr.rel (%p1904) target = $region116
        $region115: #{tpu_custom_call.1} parent=71 // pred_region
          %s1908 = ssub.s32 16, 16
          %1909 = vsyncadd %s1901, %s1908
          %s1910 = smul.addr %s41, 16
          %s1911 = scalar_lea.hbm %s13, %s1910
          %s1913 = sshll.u32 %s1903, 4
          %s1914 = int_to_ptr.vmem [resolvable:$true] %s1913
          %1916 = dma.vmem_to_hbm [thread:$0]  %s1914, 16, %s1911, %s1901
        $region116: #{tpu_custom_call.1} parent=71 // pred_fallthru
          _
      $region72: #{tpu_custom_call.1} parent=5 // pred_fallthru
        _
      %p1917 = scmp.le.s32.totalorder 2, %s36
      // Predicated region
      $region117: #{tpu_custom_call.1} parent=5 // pred_check
        %p1918 = pneg %p1917
      $region118: #{tpu_custom_call.1} parent=5 // pred_check_branch
        %1920 = sbr.rel (%p1918) target = $region120
      $region119: #{tpu_custom_call.1} parent=5 // pred_region
        %s1921 = ssub.s32 %s36, 2
        // Predicated region
        $region121: #{tpu_custom_call.1} parent=119 // pred_check
          %p1922 = pneg %p373
        $region122: #{tpu_custom_call.1} parent=119 // pred_check_branch
          %1924 = sbr.rel (%p1922) target = $region124
        $region123: #{tpu_custom_call.1} parent=119 // pred_region
          %s1925 = sand.u32 %s358, 1
          %s1926 = scalar_lea.sflag [#allocation4], %s1925
          %s1927 = sand.u32 %s358, 1
          %s1928 = scalar_lea.vmem [#allocation19], %s1927
          %1929 = dma.done %s1926, 16
        $region124: #{tpu_custom_call.1} parent=119 // pred_fallthru
          _
      $region120: #{tpu_custom_call.1} parent=5 // pred_fallthru
        _
    $region6: #{tpu_custom_call.1} parent=1 // loop_footer
      %s40 = sadd.s32 1, %s36
    $region7: #{tpu_custom_call.1} parent=1 // loop_footer_branch
      %35 = sbr.rel target = $region3
    $region8: #{tpu_custom_call.1} parent=1 // loop_exit
      _
    %1930 = vsyncpa [#allocation3], 1
    %s1931 = scalar_lea.sflag [#allocation3], 1
    %1932 = vsyncpa %s1931, 1
    %1933 = vsyncpa [#allocation6], 1
    %s1934 = scalar_lea.sflag [#allocation6], 1
    %1935 = vsyncpa %s1934, 1
    %1936 = vsyncpa [#allocation9], 1
    %s1937 = scalar_lea.sflag [#allocation9], 1
    %1938 = vsyncpa %s1937, 1
    %1939 = vsyncpa [#allocation12], 1
    %s1940 = scalar_lea.sflag [#allocation12], 1
    %1941 = vsyncpa %s1940, 1
    %1942 = vsyncpa [#allocation15], 1
    %1943 = vsyncpa [#allocation18], 1
    %1944 = vsyncpa [#allocation4], 1
    %s1945 = scalar_lea.sflag [#allocation4], 1
    %1946 = vsyncpa %s1945, 1

</llo_original>
